<compile_context>
chip_gen: v7x
topology: tpu7x:2x2x1
jax: 0.10.0
libtpu: 0.0.40
codegen_flags: <defaults>
</compile_context>

<pallas_src>
import functools

import numpy as np
import jax
import jax.numpy as jnp
from jax import lax
from jax.experimental import pallas as pl
from jax.experimental.pallas import tpu as pltpu


# ----------------------------- Pallas kernel -----------------------------
def cnn_block_kernel(x_ref, masks_ref, bn1_ref, w1_ref, c1_ref,
                     w2_ref, c2_ref, w3_ref, b3_ref, o_ref, *, taps):
    # x_ref : (1, Cin,  S_pad)   one sample, channels-first, spatial on lanes
    # o_ref : (1, Cout, S_pad)
    # masks : (9, 1, S_pad)      per-tap validity masks (conv zero-padding)
    # taps  : static tuple of (lane_roll_shift, needs_mask) per 3x3 tap
    x = x_ref[0, :, :]                                           # (Cin, S_pad)

    # --- stage 1: BN1 (eval, folded scale/shift) + ReLU ---
    a1 = jnp.maximum(x * bn1_ref[0] + bn1_ref[1], 0.0)           # (Cin, S_pad)

    # --- conv1 (1x1) with BN2 pre-folded into the weights/bias, then ReLU ---
    a2 = jnp.maximum(
        jnp.dot(w1_ref[...], a1, preferred_element_type=jnp.float32)
        + c1_ref[...], 0.0)                                      # (C1, S_pad)

    # --- conv2 (3x3, grouped) as 9 accumulated matmuls over rolled taps ---
    # tap_k[p] = a2[p + off_k]; image-border zero padding via precomputed masks.
    acc = None
    for k, (shift, needs_mask) in enumerate(taps):
        t = a2 if shift == 0 else pltpu.roll(a2, shift=shift, axis=1)
        if needs_mask:
            t = t * masks_ref[k]                                 # (1,S_pad) bcast
        d = jnp.dot(w2_ref[k], t, preferred_element_type=jnp.float32)
        acc = d if acc is None else acc + d

    # --- BN3 (folded into conv2) + ReLU, then grouped 1x1 conv3 ---
    a3 = jnp.maximum(acc + c2_ref[...], 0.0)                     # (C1, S_pad)
    y3 = (jnp.dot(w3_ref[...], a3, preferred_element_type=jnp.float32)
          + b3_ref[...])                                         # (Cout, S_pad)
    o_ref[0, :, :] = y3


# ----------------------------- helpers -----------------------------
def _conv_masks_and_taps(H, W, S_pad):
    """Static per-tap lane-roll shifts and validity masks for a 3x3 same conv."""
    S = H * W
    p = np.arange(S_pad)
    row, col = p // W, p % W
    in_img = p < S
    masks = np.zeros((9, 1, S_pad), np.float32)
    taps = []
    for kh in range(3):
        for kw in range(3):
            k = kh * 3 + kw
            sr, sc = row + kh - 1, col + kw - 1
            m = in_img & (sr >= 0) & (sr < H) & (sc >= 0) & (sc < W)
            masks[k, 0, :] = m
            off = (kh - 1) * W + (kw - 1)               # tap source offset
            taps.append(((-off) % S_pad, not bool(m.all())))
    return masks, tuple(taps)


def grouped_to_dense_hwio(w_oihw, groups):
    """PyTorch OIHW grouped weight -> dense HWIO (kh, kw, Cin, Cout), zeros off-group."""
    O, I_g, kh, kw = w_oihw.shape
    I = I_g * groups
    o_g = O // groups
    w_hwio = jnp.transpose(w_oihw, (2, 3, 1, 0))                 # (kh, kw, I_g, O)
    dense = jnp.zeros((kh, kw, I, O), dtype=w_oihw.dtype)
    for gi in range(groups):
        dense = dense.at[:, :, gi * I_g:(gi + 1) * I_g,
                         gi * o_g:(gi + 1) * o_g].set(
            w_hwio[:, :, :, gi * o_g:(gi + 1) * o_g])
    return dense


def make_params(key, in_planes, out_planes):
    g = in_planes // out_planes
    if g == 0:
        g = 1
    c1 = g * out_planes
    ks = jax.random.split(key, 18)

    def bn(k0, k1, k2, k3, c):
        gamma = jax.random.uniform(k0, (c,), jnp.float32, 0.5, 1.5)
        beta = 0.1 * jax.random.normal(k1, (c,), jnp.float32)
        mean = 0.1 * jax.random.normal(k2, (c,), jnp.float32)
        var = jax.random.uniform(k3, (c,), jnp.float32, 0.5, 1.5)
        scale = gamma / jnp.sqrt(var + 1e-5)
        shift = beta - mean * scale
        return scale, shift

    s1, t1 = bn(ks[0], ks[1], ks[2], ks[3], in_planes)
    s2, t2 = bn(ks[4], ks[5], ks[6], ks[7], c1)
    s3, t3 = bn(ks[8], ks[9], ks[10], ks[11], c1)

    w1 = 0.1 * jax.random.normal(ks[12], (c1, in_planes, 1, 1), jnp.float32)      # OIHW
    b1 = 0.1 * jax.random.normal(ks[13], (c1,), jnp.float32)
    w2 = 0.1 * jax.random.normal(ks[14], (c1, c1 // g, 3, 3), jnp.float32)        # OIHW, groups=g
    b2 = 0.1 * jax.random.normal(ks[15], (c1,), jnp.float32)
    w3 = 0.1 * jax.random.normal(ks[16], (out_planes, c1 // out_planes, 1, 1),
                                 jnp.float32)                                     # OIHW, groups=out_planes
    b3 = 0.1 * jax.random.normal(ks[17], (out_planes,), jnp.float32)

    return dict(g=g, in_planes=in_planes, out_planes=out_planes, c1=c1,
                bn1_scale=s1, bn1_shift=t1, bn2_scale=s2, bn2_shift=t2,
                bn3_scale=s3, bn3_shift=t3,
                w1=w1, b1=b1, w2=w2, b2=b2, w3=w3, b3=b3)


# ----------------------------- wrapper -----------------------------
def cnn_block_forward(x_nchw, params):
    x = x_nchw.astype(jnp.float32)
    N, Cin, H, W = x.shape
    c1 = params['c1']
    cout = params['out_planes']
    g = params['g']

    S = H * W
    S_pad = ((S + 127) // 128) * 128                    # lane-dense working width
    masks_np, taps = _conv_masks_and_taps(H, W, S_pad)

    # channels-first, spatial folded onto the lane axis (free reshape)
    xf = x.reshape(N, Cin, S)
    if S_pad != S:
        xf = jnp.pad(xf, ((0, 0), (0, 0), (0, S_pad - S)))

    s1, t1 = params['bn1_scale'], params['bn1_shift']
    s2, t2 = params['bn2_scale'], params['bn2_shift']
    s3, t3 = params['bn3_scale'], params['bn3_shift']

    # BN1 stays explicit (ReLU sits between it and conv1); pack scale+shift.
    bn1 = jnp.stack([s1, t1], axis=0).reshape(2, Cin, 1)

    # conv1 with BN2 folded:  a2 = relu(W1' @ a1 + c1')
    w1 = params['w1'][:, :, 0, 0]                                 # (C1, Cin)
    w1f = s2[:, None] * w1
    c1f = (s2 * params['b1'] + t2).reshape(c1, 1)

    # conv2 (3x3 grouped -> dense block-diagonal) with BN3 folded, per-tap matrices
    w2_hwio = grouped_to_dense_hwio(params['w2'], g)              # (3,3,C1in,C1out)
    w2_taps = jnp.transpose(w2_hwio, (0, 1, 3, 2)).reshape(9, c1, c1)  # [k, out, in]
    w2f = s3[None, :, None] * w2_taps
    c2f = (s3 * params['b2'] + t3).reshape(c1, 1)

    # conv3 (grouped 1x1 -> dense block-diagonal)
    w3 = grouped_to_dense_hwio(params['w3'], cout)[0, 0].T        # (Cout, C1)
    b3 = params['b3'].reshape(cout, 1)

    masks = jnp.asarray(masks_np)                                 # (9, 1, S_pad)
    param_list = [masks, bn1, w1f, c1f, w2f, c2f, w3, b3]

    def _const_spec(a):
        zeros = (0,) * a.ndim
        return pl.BlockSpec(a.shape, lambda n, _z=zeros: _z)

    kernel = functools.partial(cnn_block_kernel, taps=taps)

    out_flat = pl.pallas_call(
        kernel,
        out_shape=jax.ShapeDtypeStruct((N, cout, S_pad), jnp.float32),
        grid=(N,),
        in_specs=[pl.BlockSpec((1, Cin, S_pad), lambda n: (n, 0, 0))]
                 + [_const_spec(a) for a in param_list],
        out_specs=pl.BlockSpec((1, cout, S_pad), lambda n: (n, 0, 0)),
        compiler_params=pltpu.CompilerParams(
            dimension_semantics=("parallel",)),
    )(xf, *param_list)

    if S_pad != S:
        out_flat = out_flat[:, :, :S]
    return out_flat.reshape(N, cout, H, W)                        # already NCHW


# --------------------- pure-JAX reference (for checking) ---------------------
def reference_forward(x_nchw, params):
    dn = ('NCHW', 'OIHW', 'NCHW')

    def bn_relu(x, scale, shift):
        return jnp.maximum(
            x * scale[None, :, None, None] + shift[None, :, None, None], 0.0)

    a = bn_relu(x_nchw, params['bn1_scale'], params['bn1_shift'])
    y = lax.conv_general_dilated(a, params['w1'], (1, 1), 'VALID',
                                 dimension_numbers=dn) \
        + params['b1'][None, :, None, None]
    a = bn_relu(y, params['bn2_scale'], params['bn2_shift'])
    y = lax.conv_general_dilated(a, params['w2'], (1, 1), ((1, 1), (1, 1)),
                                 dimension_numbers=dn,
                                 feature_group_count=params['g']) \
        + params['b2'][None, :, None, None]
    a = bn_relu(y, params['bn3_scale'], params['bn3_shift'])
    y = lax.conv_general_dilated(a, params['w3'], (1, 1), 'VALID',
                                 dimension_numbers=dn,
                                 feature_group_count=params['out_planes']) \
        + params['b3'][None, :, None, None]
    return y


# ----------------------------- main -----------------------------
if __name__ == "__main__":
    key = jax.random.PRNGKey(0)
    kx, kp = jax.random.split(key)

    N, in_planes, out_planes, H, W = 2, 8, 4, 16, 16       # g = 8 // 4 = 2
    x = jax.random.normal(kx, (N, in_planes, H, W), jnp.float32)
    params = make_params(kp, in_planes, out_planes)

    out = cnn_block_forward(x, params)
    out = jax.block_until_ready(out)

    ref = reference_forward(x, params)
    np.testing.assert_allclose(np.asarray(out), np.asarray(ref),
                               rtol=1e-4, atol=1e-4)
    print("KERNEL_OK")
</pallas_src>

<mosaic_0001>
module attributes {stable_mosaic.version = 11 : i64} {
  func.func @cnn_block_kernel(%arg0: i32, %arg1: memref<1x8x256xf32, #tpu.memory_space<vmem>>, %arg2: memref<9x1x256xf32, #tpu.memory_space<vmem>>, %arg3: memref<2x8x1xf32, #tpu.memory_space<vmem>>, %arg4: memref<8x8xf32, #tpu.memory_space<vmem>>, %arg5: memref<8x1xf32, #tpu.memory_space<vmem>>, %arg6: memref<9x8x8xf32, #tpu.memory_space<vmem>>, %arg7: memref<8x1xf32, #tpu.memory_space<vmem>>, %arg8: memref<4x8xf32, #tpu.memory_space<vmem>>, %arg9: memref<4x1xf32, #tpu.memory_space<vmem>>, %arg10: memref<1x4x256xf32, #tpu.memory_space<vmem>>) attributes {dimension_semantics = [#tpu.dimension_semantics<parallel>], iteration_bounds = array<i64: 2>, scalar_prefetch = 0 : i64, scratch_operands = 0 : i64, tpu.core_type = #tpu.core_type<tc>, window_params = [{transform_indices = @transform_0, window_bounds = array<i64: 1, 8, 256>}, {pipeline_mode = #tpu.pipeline_mode<synchronous>, transform_indices = @transform_1, window_bounds = array<i64: 9, 1, 256>}, {pipeline_mode = #tpu.pipeline_mode<synchronous>, transform_indices = @transform_2, window_bounds = array<i64: 2, 8, 1>}, {pipeline_mode = #tpu.pipeline_mode<synchronous>, transform_indices = @transform_3, window_bounds = array<i64: 8, 8>}, {pipeline_mode = #tpu.pipeline_mode<synchronous>, transform_indices = @transform_4, window_bounds = array<i64: 8, 1>}, {pipeline_mode = #tpu.pipeline_mode<synchronous>, transform_indices = @transform_5, window_bounds = array<i64: 9, 8, 8>}, {pipeline_mode = #tpu.pipeline_mode<synchronous>, transform_indices = @transform_6, window_bounds = array<i64: 8, 1>}, {pipeline_mode = #tpu.pipeline_mode<synchronous>, transform_indices = @transform_7, window_bounds = array<i64: 4, 8>}, {pipeline_mode = #tpu.pipeline_mode<synchronous>, transform_indices = @transform_8, window_bounds = array<i64: 4, 1>}, {transform_indices = @transform_9, window_bounds = array<i64: 1, 4, 256>}]} {
    %c0 = arith.constant 0 : index
    %c0_0 = arith.constant 0 : index
    %c0_1 = arith.constant 0 : index
    %0 = vector.load %arg1[%c0, %c0_0, %c0_1] : memref<1x8x256xf32, #tpu.memory_space<vmem>>, vector<1x8x256xf32>
    %1 = vector.shape_cast %0 : vector<1x8x256xf32> to vector<8x256xf32>
    %c0_2 = arith.constant 0 : index
    %c0_3 = arith.constant 0 : index
    %c0_4 = arith.constant 0 : index
    %2 = vector.load %arg3[%c0_2, %c0_3, %c0_4] : memref<2x8x1xf32, #tpu.memory_space<vmem>>, vector<1x8x1xf32>
    %3 = vector.shape_cast %2 : vector<1x8x1xf32> to vector<8x1xf32>
    %4 = vector.broadcast %3 : vector<8x1xf32> to vector<8x256xf32>
    %5 = arith.mulf %1, %4 : vector<8x256xf32>
    %c1 = arith.constant 1 : index
    %c0_5 = arith.constant 0 : index
    %c0_6 = arith.constant 0 : index
    %6 = vector.load %arg3[%c1, %c0_5, %c0_6] : memref<2x8x1xf32, #tpu.memory_space<vmem>>, vector<1x8x1xf32>
    %7 = vector.shape_cast %6 : vector<1x8x1xf32> to vector<8x1xf32>
    %8 = vector.broadcast %7 : vector<8x1xf32> to vector<8x256xf32>
    %9 = arith.addf %5, %8 : vector<8x256xf32>
    %cst = arith.constant 0.000000e+00 : f32
    %10 = vector.broadcast %cst : f32 to vector<8x256xf32>
    %11 = arith.maximumf %9, %10 : vector<8x256xf32>
    %c0_7 = arith.constant 0 : index
    %c0_8 = arith.constant 0 : index
    %12 = vector.load %arg4[%c0_7, %c0_8] : memref<8x8xf32, #tpu.memory_space<vmem>>, vector<8x8xf32>
    %cst_9 = arith.constant dense<0.000000e+00> : vector<8x256xf32>
    %13 = tpu.matmul %12, %11, %cst_9 {dimension_numbers = #tpu.dot_dimension_numbers<[1], [0], [0], [1], [0, 0, 1, 1], [], []>} : vector<8x8xf32>, vector<8x256xf32>, vector<8x256xf32> -> vector<8x256xf32>
    %c0_10 = arith.constant 0 : index
    %c0_11 = arith.constant 0 : index
    %14 = vector.load %arg5[%c0_10, %c0_11] : memref<8x1xf32, #tpu.memory_space<vmem>>, vector<8x1xf32>
    %15 = vector.broadcast %14 : vector<8x1xf32> to vector<8x256xf32>
    %16 = arith.addf %13, %15 : vector<8x256xf32>
    %cst_12 = arith.constant 0.000000e+00 : f32
    %17 = vector.broadcast %cst_12 : f32 to vector<8x256xf32>
    %18 = arith.maximumf %16, %17 : vector<8x256xf32>
    %c17_i32 = arith.constant 17 : i32
    %19 = tpu.dynamic_rotate %18 by %c17_i32 dim 1 : vector<8x256xf32>, i32 -> vector<8x256xf32>
    %c0_13 = arith.constant 0 : index
    %c0_14 = arith.constant 0 : index
    %c0_15 = arith.constant 0 : index
    %20 = vector.load %arg2[%c0_13, %c0_14, %c0_15] : memref<9x1x256xf32, #tpu.memory_space<vmem>>, vector<1x1x256xf32>
    %21 = vector.shape_cast %20 : vector<1x1x256xf32> to vector<1x256xf32>
    %22 = vector.broadcast %21 : vector<1x256xf32> to vector<8x256xf32>
    %23 = arith.mulf %19, %22 : vector<8x256xf32>
    %c0_16 = arith.constant 0 : index
    %c0_17 = arith.constant 0 : index
    %c0_18 = arith.constant 0 : index
    %24 = vector.load %arg6[%c0_16, %c0_17, %c0_18] : memref<9x8x8xf32, #tpu.memory_space<vmem>>, vector<1x8x8xf32>
    %25 = vector.shape_cast %24 : vector<1x8x8xf32> to vector<8x8xf32>
    %cst_19 = arith.constant dense<0.000000e+00> : vector<8x256xf32>
    %26 = tpu.matmul %25, %23, %cst_19 {dimension_numbers = #tpu.dot_dimension_numbers<[1], [0], [0], [1], [0, 0, 1, 1], [], []>} : vector<8x8xf32>, vector<8x256xf32>, vector<8x256xf32> -> vector<8x256xf32>
    %c16_i32 = arith.constant 16 : i32
    %27 = tpu.dynamic_rotate %18 by %c16_i32 dim 1 : vector<8x256xf32>, i32 -> vector<8x256xf32>
    %c1_20 = arith.constant 1 : index
    %c0_21 = arith.constant 0 : index
    %c0_22 = arith.constant 0 : index
    %28 = vector.load %arg2[%c1_20, %c0_21, %c0_22] : memref<9x1x256xf32, #tpu.memory_space<vmem>>, vector<1x1x256xf32>
    %29 = vector.shape_cast %28 : vector<1x1x256xf32> to vector<1x256xf32>
    %30 = vector.broadcast %29 : vector<1x256xf32> to vector<8x256xf32>
    %31 = arith.mulf %27, %30 : vector<8x256xf32>
    %c1_23 = arith.constant 1 : index
    %c0_24 = arith.constant 0 : index
    %c0_25 = arith.constant 0 : index
    %32 = vector.load %arg6[%c1_23, %c0_24, %c0_25] : memref<9x8x8xf32, #tpu.memory_space<vmem>>, vector<1x8x8xf32>
    %33 = vector.shape_cast %32 : vector<1x8x8xf32> to vector<8x8xf32>
    %cst_26 = arith.constant dense<0.000000e+00> : vector<8x256xf32>
    %34 = tpu.matmul %33, %31, %cst_26 {dimension_numbers = #tpu.dot_dimension_numbers<[1], [0], [0], [1], [0, 0, 1, 1], [], []>} : vector<8x8xf32>, vector<8x256xf32>, vector<8x256xf32> -> vector<8x256xf32>
    %35 = arith.addf %26, %34 : vector<8x256xf32>
    %c15_i32 = arith.constant 15 : i32
    %36 = tpu.dynamic_rotate %18 by %c15_i32 dim 1 : vector<8x256xf32>, i32 -> vector<8x256xf32>
    %c2 = arith.constant 2 : index
    %c0_27 = arith.constant 0 : index
    %c0_28 = arith.constant 0 : index
    %37 = vector.load %arg2[%c2, %c0_27, %c0_28] : memref<9x1x256xf32, #tpu.memory_space<vmem>>, vector<1x1x256xf32>
    %38 = vector.shape_cast %37 : vector<1x1x256xf32> to vector<1x256xf32>
    %39 = vector.broadcast %38 : vector<1x256xf32> to vector<8x256xf32>
    %40 = arith.mulf %36, %39 : vector<8x256xf32>
    %c2_29 = arith.constant 2 : index
    %c0_30 = arith.constant 0 : index
    %c0_31 = arith.constant 0 : index
    %41 = vector.load %arg6[%c2_29, %c0_30, %c0_31] : memref<9x8x8xf32, #tpu.memory_space<vmem>>, vector<1x8x8xf32>
    %42 = vector.shape_cast %41 : vector<1x8x8xf32> to vector<8x8xf32>
    %cst_32 = arith.constant dense<0.000000e+00> : vector<8x256xf32>
    %43 = tpu.matmul %42, %40, %cst_32 {dimension_numbers = #tpu.dot_dimension_numbers<[1], [0], [0], [1], [0, 0, 1, 1], [], []>} : vector<8x8xf32>, vector<8x256xf32>, vector<8x256xf32> -> vector<8x256xf32>
    %44 = arith.addf %35, %43 : vector<8x256xf32>
    %c1_i32 = arith.constant 1 : i32
    %45 = tpu.dynamic_rotate %18 by %c1_i32 dim 1 : vector<8x256xf32>, i32 -> vector<8x256xf32>
    %c3 = arith.constant 3 : index
    %c0_33 = arith.constant 0 : index
    %c0_34 = arith.constant 0 : index
    %46 = vector.load %arg2[%c3, %c0_33, %c0_34] : memref<9x1x256xf32, #tpu.memory_space<vmem>>, vector<1x1x256xf32>
    %47 = vector.shape_cast %46 : vector<1x1x256xf32> to vector<1x256xf32>
    %48 = vector.broadcast %47 : vector<1x256xf32> to vector<8x256xf32>
    %49 = arith.mulf %45, %48 : vector<8x256xf32>
    %c3_35 = arith.constant 3 : index
    %c0_36 = arith.constant 0 : index
    %c0_37 = arith.constant 0 : index
    %50 = vector.load %arg6[%c3_35, %c0_36, %c0_37] : memref<9x8x8xf32, #tpu.memory_space<vmem>>, vector<1x8x8xf32>
    %51 = vector.shape_cast %50 : vector<1x8x8xf32> to vector<8x8xf32>
    %cst_38 = arith.constant dense<0.000000e+00> : vector<8x256xf32>
    %52 = tpu.matmul %51, %49, %cst_38 {dimension_numbers = #tpu.dot_dimension_numbers<[1], [0], [0], [1], [0, 0, 1, 1], [], []>} : vector<8x8xf32>, vector<8x256xf32>, vector<8x256xf32> -> vector<8x256xf32>
    %53 = arith.addf %44, %52 : vector<8x256xf32>
    %c4 = arith.constant 4 : index
    %c0_39 = arith.constant 0 : index
    %c0_40 = arith.constant 0 : index
    %54 = vector.load %arg6[%c4, %c0_39, %c0_40] : memref<9x8x8xf32, #tpu.memory_space<vmem>>, vector<1x8x8xf32>
    %55 = vector.shape_cast %54 : vector<1x8x8xf32> to vector<8x8xf32>
    %cst_41 = arith.constant dense<0.000000e+00> : vector<8x256xf32>
    %56 = tpu.matmul %55, %18, %cst_41 {dimension_numbers = #tpu.dot_dimension_numbers<[1], [0], [0], [1], [0, 0, 1, 1], [], []>} : vector<8x8xf32>, vector<8x256xf32>, vector<8x256xf32> -> vector<8x256xf32>
    %57 = arith.addf %53, %56 : vector<8x256xf32>
    %c255_i32 = arith.constant 255 : i32
    %58 = tpu.dynamic_rotate %18 by %c255_i32 dim 1 : vector<8x256xf32>, i32 -> vector<8x256xf32>
    %c5 = arith.constant 5 : index
    %c0_42 = arith.constant 0 : index
    %c0_43 = arith.constant 0 : index
    %59 = vector.load %arg2[%c5, %c0_42, %c0_43] : memref<9x1x256xf32, #tpu.memory_space<vmem>>, vector<1x1x256xf32>
    %60 = vector.shape_cast %59 : vector<1x1x256xf32> to vector<1x256xf32>
    %61 = vector.broadcast %60 : vector<1x256xf32> to vector<8x256xf32>
    %62 = arith.mulf %58, %61 : vector<8x256xf32>
    %c5_44 = arith.constant 5 : index
    %c0_45 = arith.constant 0 : index
    %c0_46 = arith.constant 0 : index
    %63 = vector.load %arg6[%c5_44, %c0_45, %c0_46] : memref<9x8x8xf32, #tpu.memory_space<vmem>>, vector<1x8x8xf32>
    %64 = vector.shape_cast %63 : vector<1x8x8xf32> to vector<8x8xf32>
    %cst_47 = arith.constant dense<0.000000e+00> : vector<8x256xf32>
    %65 = tpu.matmul %64, %62, %cst_47 {dimension_numbers = #tpu.dot_dimension_numbers<[1], [0], [0], [1], [0, 0, 1, 1], [], []>} : vector<8x8xf32>, vector<8x256xf32>, vector<8x256xf32> -> vector<8x256xf32>
    %66 = arith.addf %57, %65 : vector<8x256xf32>
    %c241_i32 = arith.constant 241 : i32
    %67 = tpu.dynamic_rotate %18 by %c241_i32 dim 1 : vector<8x256xf32>, i32 -> vector<8x256xf32>
    %c6 = arith.constant 6 : index
    %c0_48 = arith.constant 0 : index
    %c0_49 = arith.constant 0 : index
    %68 = vector.load %arg2[%c6, %c0_48, %c0_49] : memref<9x1x256xf32, #tpu.memory_space<vmem>>, vector<1x1x256xf32>
    %69 = vector.shape_cast %68 : vector<1x1x256xf32> to vector<1x256xf32>
    %70 = vector.broadcast %69 : vector<1x256xf32> to vector<8x256xf32>
    %71 = arith.mulf %67, %70 : vector<8x256xf32>
    %c6_50 = arith.constant 6 : index
    %c0_51 = arith.constant 0 : index
    %c0_52 = arith.constant 0 : index
    %72 = vector.load %arg6[%c6_50, %c0_51, %c0_52] : memref<9x8x8xf32, #tpu.memory_space<vmem>>, vector<1x8x8xf32>
    %73 = vector.shape_cast %72 : vector<1x8x8xf32> to vector<8x8xf32>
    %cst_53 = arith.constant dense<0.000000e+00> : vector<8x256xf32>
    %74 = tpu.matmul %73, %71, %cst_53 {dimension_numbers = #tpu.dot_dimension_numbers<[1], [0], [0], [1], [0, 0, 1, 1], [], []>} : vector<8x8xf32>, vector<8x256xf32>, vector<8x256xf32> -> vector<8x256xf32>
    %75 = arith.addf %66, %74 : vector<8x256xf32>
    %c240_i32 = arith.constant 240 : i32
    %76 = tpu.dynamic_rotate %18 by %c240_i32 dim 1 : vector<8x256xf32>, i32 -> vector<8x256xf32>
    %c7 = arith.constant 7 : index
    %c0_54 = arith.constant 0 : index
    %c0_55 = arith.constant 0 : index
    %77 = vector.load %arg2[%c7, %c0_54, %c0_55] : memref<9x1x256xf32, #tpu.memory_space<vmem>>, vector<1x1x256xf32>
    %78 = vector.shape_cast %77 : vector<1x1x256xf32> to vector<1x256xf32>
    %79 = vector.broadcast %78 : vector<1x256xf32> to vector<8x256xf32>
    %80 = arith.mulf %76, %79 : vector<8x256xf32>
    %c7_56 = arith.constant 7 : index
    %c0_57 = arith.constant 0 : index
    %c0_58 = arith.constant 0 : index
    %81 = vector.load %arg6[%c7_56, %c0_57, %c0_58] : memref<9x8x8xf32, #tpu.memory_space<vmem>>, vector<1x8x8xf32>
    %82 = vector.shape_cast %81 : vector<1x8x8xf32> to vector<8x8xf32>
    %cst_59 = arith.constant dense<0.000000e+00> : vector<8x256xf32>
    %83 = tpu.matmul %82, %80, %cst_59 {dimension_numbers = #tpu.dot_dimension_numbers<[1], [0], [0], [1], [0, 0, 1, 1], [], []>} : vector<8x8xf32>, vector<8x256xf32>, vector<8x256xf32> -> vector<8x256xf32>
    %84 = arith.addf %75, %83 : vector<8x256xf32>
    %c239_i32 = arith.constant 239 : i32
    %85 = tpu.dynamic_rotate %18 by %c239_i32 dim 1 : vector<8x256xf32>, i32 -> vector<8x256xf32>
    %c8 = arith.constant 8 : index
    %c0_60 = arith.constant 0 : index
    %c0_61 = arith.constant 0 : index
    %86 = vector.load %arg2[%c8, %c0_60, %c0_61] : memref<9x1x256xf32, #tpu.memory_space<vmem>>, vector<1x1x256xf32>
    %87 = vector.shape_cast %86 : vector<1x1x256xf32> to vector<1x256xf32>
    %88 = vector.broadcast %87 : vector<1x256xf32> to vector<8x256xf32>
    %89 = arith.mulf %85, %88 : vector<8x256xf32>
    %c8_62 = arith.constant 8 : index
    %c0_63 = arith.constant 0 : index
    %c0_64 = arith.constant 0 : index
    %90 = vector.load %arg6[%c8_62, %c0_63, %c0_64] : memref<9x8x8xf32, #tpu.memory_space<vmem>>, vector<1x8x8xf32>
    %91 = vector.shape_cast %90 : vector<1x8x8xf32> to vector<8x8xf32>
    %cst_65 = arith.constant dense<0.000000e+00> : vector<8x256xf32>
    %92 = tpu.matmul %91, %89, %cst_65 {dimension_numbers = #tpu.dot_dimension_numbers<[1], [0], [0], [1], [0, 0, 1, 1], [], []>} : vector<8x8xf32>, vector<8x256xf32>, vector<8x256xf32> -> vector<8x256xf32>
    %93 = arith.addf %84, %92 : vector<8x256xf32>
    %c0_66 = arith.constant 0 : index
    %c0_67 = arith.constant 0 : index
    %94 = vector.load %arg7[%c0_66, %c0_67] : memref<8x1xf32, #tpu.memory_space<vmem>>, vector<8x1xf32>
    %95 = vector.broadcast %94 : vector<8x1xf32> to vector<8x256xf32>
    %96 = arith.addf %93, %95 : vector<8x256xf32>
    %cst_68 = arith.constant 0.000000e+00 : f32
    %97 = vector.broadcast %cst_68 : f32 to vector<8x256xf32>
    %98 = arith.maximumf %96, %97 : vector<8x256xf32>
    %c0_69 = arith.constant 0 : index
    %c0_70 = arith.constant 0 : index
    %99 = vector.load %arg8[%c0_69, %c0_70] : memref<4x8xf32, #tpu.memory_space<vmem>>, vector<4x8xf32>
    %cst_71 = arith.constant dense<0.000000e+00> : vector<4x256xf32>
    %100 = tpu.matmul %99, %98, %cst_71 {dimension_numbers = #tpu.dot_dimension_numbers<[1], [0], [0], [1], [0, 0, 1, 1], [], []>} : vector<4x8xf32>, vector<8x256xf32>, vector<4x256xf32> -> vector<4x256xf32>
    %c0_72 = arith.constant 0 : index
    %c0_73 = arith.constant 0 : index
    %101 = vector.load %arg9[%c0_72, %c0_73] : memref<4x1xf32, #tpu.memory_space<vmem>>, vector<4x1xf32>
    %102 = vector.broadcast %101 : vector<4x1xf32> to vector<4x256xf32>
    %103 = arith.addf %100, %102 : vector<4x256xf32>
    %c0_74 = arith.constant 0 : index
    %c0_75 = arith.constant 0 : index
    %c0_76 = arith.constant 0 : index
    %104 = vector.load %arg10[%c0_74, %c0_75, %c0_76] : memref<1x4x256xf32, #tpu.memory_space<vmem>>, vector<1x4x256xf32>
    %105 = vector.shape_cast %104 : vector<1x4x256xf32> to vector<4x256xf32>
    %106 = vector.shape_cast %103 : vector<4x256xf32> to vector<1x4x256xf32>
    tpu.vector_store %arg10[%c0_74, %c0_75, %c0_76], %106 {strides = array<i32>} : memref<1x4x256xf32, #tpu.memory_space<vmem>>, vector<1x4x256xf32>,
    return
  }
  func.func @transform_0(%arg0: i32) -> (i32, i32, i32) {
    %c0_i32 = arith.constant 0 : i32
    %c0_i32_0 = arith.constant 0 : i32
    %c0_i32_1 = arith.constant 0 : i32
    return %arg0, %c0_i32, %c0_i32_0 : i32, i32, i32
  }
  func.func @transform_1(%arg0: i32) -> (i32, i32, i32) {
    %c0_i32 = arith.constant 0 : i32
    %c0_i32_0 = arith.constant 0 : i32
    %c0_i32_1 = arith.constant 0 : i32
    %c0_i32_2 = arith.constant 0 : i32
    return %c0_i32, %c0_i32_0, %c0_i32_1 : i32, i32, i32
  }
  func.func @transform_2(%arg0: i32) -> (i32, i32, i32) {
    %c0_i32 = arith.constant 0 : i32
    %c0_i32_0 = arith.constant 0 : i32
    %c0_i32_1 = arith.constant 0 : i32
    %c0_i32_2 = arith.constant 0 : i32
    return %c0_i32, %c0_i32_0, %c0_i32_1 : i32, i32, i32
  }
  func.func @transform_3(%arg0: i32) -> (i32, i32) {
    %c0_i32 = arith.constant 0 : i32
    %c0_i32_0 = arith.constant 0 : i32
    %c0_i32_1 = arith.constant 0 : i32
    return %c0_i32, %c0_i32_0 : i32, i32
  }
  func.func @transform_4(%arg0: i32) -> (i32, i32) {
    %c0_i32 = arith.constant 0 : i32
    %c0_i32_0 = arith.constant 0 : i32
    %c0_i32_1 = arith.constant 0 : i32
    return %c0_i32, %c0_i32_0 : i32, i32
  }
  func.func @transform_5(%arg0: i32) -> (i32, i32, i32) {
    %c0_i32 = arith.constant 0 : i32
    %c0_i32_0 = arith.constant 0 : i32
    %c0_i32_1 = arith.constant 0 : i32
    %c0_i32_2 = arith.constant 0 : i32
    return %c0_i32, %c0_i32_0, %c0_i32_1 : i32, i32, i32
  }
  func.func @transform_6(%arg0: i32) -> (i32, i32) {
    %c0_i32 = arith.constant 0 : i32
    %c0_i32_0 = arith.constant 0 : i32
    %c0_i32_1 = arith.constant 0 : i32
    return %c0_i32, %c0_i32_0 : i32, i32
  }
  func.func @transform_7(%arg0: i32) -> (i32, i32) {
    %c0_i32 = arith.constant 0 : i32
    %c0_i32_0 = arith.constant 0 : i32
    %c0_i32_1 = arith.constant 0 : i32
    return %c0_i32, %c0_i32_0 : i32, i32
  }
  func.func @transform_8(%arg0: i32) -> (i32, i32) {
    %c0_i32 = arith.constant 0 : i32
    %c0_i32_0 = arith.constant 0 : i32
    %c0_i32_1 = arith.constant 0 : i32
    return %c0_i32, %c0_i32_0 : i32, i32
  }
  func.func @transform_9(%arg0: i32) -> (i32, i32, i32) {
    %c0_i32 = arith.constant 0 : i32
    %c0_i32_0 = arith.constant 0 : i32
    %c0_i32_1 = arith.constant 0 : i32
    return %arg0, %c0_i32, %c0_i32_0 : i32, i32, i32
  }
}

</mosaic_0001>

<llo_original>
// kernel: tpu_custom_call.1
$region0: #{tpu_custom_call.1}
  #allocation0 [shape = 'u32[]', space=smem, size = 0x4, offset = 0x4, fixed_abs, tag = 'smem constant byte address 0x4 - core index']
  #allocation1 [shape = 'u32[144,128]{1,0:T(1,128)}', space=vmem, size = 0x12000, scoped, tag = 'internal scratch']
  %s0 = inlined_call_operand.vmem [shape: f32[2,8,256], index: 0, kind: input, shape index: {}]
  %s1 = inlined_call_operand.vmem [shape: f32[9,1,256], index: 1, kind: input, shape index: {}]
  %s2 = inlined_call_operand.vmem [shape: f32[2,8,1], index: 2, kind: input, shape index: {}]
  %s3 = inlined_call_operand.vmem [shape: f32[8,8], index: 3, kind: input, shape index: {}]
  %s4 = inlined_call_operand.vmem [shape: f32[8,1], index: 4, kind: input, shape index: {}]
  %s5 = inlined_call_operand.vmem [shape: f32[9,8,8], index: 5, kind: input, shape index: {}]
  %s6 = inlined_call_operand.vmem [shape: f32[8,1], index: 6, kind: input, shape index: {}]
  %s7 = inlined_call_operand.vmem [shape: f32[4,8], index: 7, kind: input, shape index: {}]
  %s8 = inlined_call_operand.vmem [shape: f32[4,1], index: 8, kind: input, shape index: {}]
  %s9 = inlined_call_operand.hbm [shape: f32[2,4,256], index: 9, kind: output, shape index: {}]
  %s10 = sld [smem:[#allocation0]]
  $region69: #{tpu_custom_call.1} parent=0
    _
  %s12 = ssub.s32 1, %s10
  %s13 = scalar_select 0, %s12, %s10
  $region1: #{tpu_custom_call.1} parent=0
    #allocation2 [shape = 'u8[8192]{0}', space=vmem, size = 0x2000, scoped, tag = 'output window, operand 0']
    #allocation3 [shape = 's32[2]{0}', space=sflag, size = 0x8, scoped, tag = 'scoped memory for tpu_custom_call.1']
    %14 = vsyncpa [#allocation3], 0
    %s15 = scalar_lea.sflag [#allocation3], 1
    %16 = vsyncpa %s15, 0
    loop: start=0, step=1, limit=4
    $region2: #{tpu_custom_call.1} parent=1 // loop_pre_header
      _
    $region3: #{tpu_custom_call.1} parent=1 // loop_header
      %s18 = sphi 0, %s22
      %p19 = scmp.ge.s32.totalorder %s18, 4
      %s28 = sphi 0, %s30
      %s31 = sphi 0, %s28
      %s32 = sphi 0, %s31
      %s48 = sphi 0, %s32
      %s52 = sphi 0, %s52
      %s54 = sphi 0, %s52
      %s55 = sphi 0, %s54
      %s69 = sphi 0, %s55
      %s73 = sphi 0, %s73
      %s75 = sphi 0, %s73
      %s76 = sphi 0, %s75
      %s90 = sphi 0, %s76
      %s94 = sphi 0, %s94
      %s96 = sphi 0, %s94
      %s97 = sphi 0, %s96
      %s111 = sphi 0, %s97
      %s115 = sphi 0, %s115
      %s117 = sphi 0, %s115
      %s118 = sphi 0, %s117
      %s132 = sphi 0, %s118
      %s136 = sphi 0, %s136
      %s138 = sphi 0, %s136
      %s139 = sphi 0, %s138
      %s153 = sphi 0, %s139
      %s157 = sphi 0, %s157
      %s159 = sphi 0, %s157
      %s160 = sphi 0, %s159
      %s174 = sphi 0, %s160
      %s178 = sphi 0, %s178
      %s180 = sphi 0, %s178
      %s181 = sphi 0, %s180
      %s195 = sphi 0, %s181
      %s199 = sphi 0, %s199
      %s201 = sphi 0, %s199
      %s202 = sphi 0, %s201
      %s216 = sphi 0, %s202
      %s222 = sphi 0, %s224
      %s225 = sphi 0, %s222
      %s226 = sphi 0, %s225
      %s242 = sphi 0, %s226
    $region4: #{tpu_custom_call.1} parent=1 // loop_header_branch
      %21 = sbr.rel (%p19) target = $region8
    $region5: #{tpu_custom_call.1} parent=1 // loop_body
      %s23 = ssub.s32 %s18, 1
      %s24 = ssub.s32 %s18, 2
      %s25 = sadd.s32 %s18, 1
      %s26 = ssub.s32 %s18, %s25
      %p27 = scmp.eq.s32.totalorder %s26, 0
      %s29 = sadd.s32 %s28, 1
      %s30 = scalar_select %p27, %s28, %s29
      %p33 = pneg %p27
      %p34 = scmp.eq.s32.totalorder %s18, 1
      %p35 = por %p33, %p34
      %p36 = scmp.ne.s32.totalorder %s28, %s31
      %p37 = scmp.eq.s32.totalorder %s18, 0
      %p38 = por %p36, %p37
      %p39 = scmp.ne.s32.totalorder %s28, %s31
      %p40 = scmp.eq.s32.totalorder %s23, 1
      %p41 = por %p39, %p40
      %p42 = scmp.ne.s32.totalorder %s31, %s32
      %p43 = scmp.eq.s32.totalorder %s23, 0
      %p44 = por %p42, %p43
      %p45 = scmp.ne.s32.totalorder %s31, %s32
      %p46 = scmp.eq.s32.totalorder %s24, 1
      %p47 = por %p45, %p46
      %p49 = scmp.ne.s32.totalorder %s32, %s48
      %p50 = scmp.eq.s32.totalorder %s24, 0
      %p51 = por %p49, %p50
      %s53 = sadd.s32 %s52, 1
      %p56 = scmp.eq.s32.totalorder %s18, 1
      %p57 = scmp.ne.s32.totalorder %s52, %s54
      %p58 = scmp.eq.s32.totalorder %s18, 0
      %p59 = por %p57, %p58
      %p60 = scmp.ne.s32.totalorder %s52, %s54
      %p61 = scmp.eq.s32.totalorder %s23, 1
      %p62 = por %p60, %p61
      %p63 = scmp.ne.s32.totalorder %s54, %s55
      %p64 = scmp.eq.s32.totalorder %s23, 0
      %p65 = por %p63, %p64
      %p66 = scmp.ne.s32.totalorder %s54, %s55
      %p67 = scmp.eq.s32.totalorder %s24, 1
      %p68 = por %p66, %p67
      %p70 = scmp.ne.s32.totalorder %s55, %s69
      %p71 = scmp.eq.s32.totalorder %s24, 0
      %p72 = por %p70, %p71
      %s74 = sadd.s32 %s73, 1
      %p77 = scmp.eq.s32.totalorder %s18, 1
      %p78 = scmp.ne.s32.totalorder %s73, %s75
      %p79 = scmp.eq.s32.totalorder %s18, 0
      %p80 = por %p78, %p79
      %p81 = scmp.ne.s32.totalorder %s73, %s75
      %p82 = scmp.eq.s32.totalorder %s23, 1
      %p83 = por %p81, %p82
      %p84 = scmp.ne.s32.totalorder %s75, %s76
      %p85 = scmp.eq.s32.totalorder %s23, 0
      %p86 = por %p84, %p85
      %p87 = scmp.ne.s32.totalorder %s75, %s76
      %p88 = scmp.eq.s32.totalorder %s24, 1
      %p89 = por %p87, %p88
      %p91 = scmp.ne.s32.totalorder %s76, %s90
      %p92 = scmp.eq.s32.totalorder %s24, 0
      %p93 = por %p91, %p92
      %s95 = sadd.s32 %s94, 1
      %p98 = scmp.eq.s32.totalorder %s18, 1
      %p99 = scmp.ne.s32.totalorder %s94, %s96
      %p100 = scmp.eq.s32.totalorder %s18, 0
      %p101 = por %p99, %p100
      %p102 = scmp.ne.s32.totalorder %s94, %s96
      %p103 = scmp.eq.s32.totalorder %s23, 1
      %p104 = por %p102, %p103
      %p105 = scmp.ne.s32.totalorder %s96, %s97
      %p106 = scmp.eq.s32.totalorder %s23, 0
      %p107 = por %p105, %p106
      %p108 = scmp.ne.s32.totalorder %s96, %s97
      %p109 = scmp.eq.s32.totalorder %s24, 1
      %p110 = por %p108, %p109
      %p112 = scmp.ne.s32.totalorder %s97, %s111
      %p113 = scmp.eq.s32.totalorder %s24, 0
      %p114 = por %p112, %p113
      %s116 = sadd.s32 %s115, 1
      %p119 = scmp.eq.s32.totalorder %s18, 1
      %p120 = scmp.ne.s32.totalorder %s115, %s117
      %p121 = scmp.eq.s32.totalorder %s18, 0
      %p122 = por %p120, %p121
      %p123 = scmp.ne.s32.totalorder %s115, %s117
      %p124 = scmp.eq.s32.totalorder %s23, 1
      %p125 = por %p123, %p124
      %p126 = scmp.ne.s32.totalorder %s117, %s118
      %p127 = scmp.eq.s32.totalorder %s23, 0
      %p128 = por %p126, %p127
      %p129 = scmp.ne.s32.totalorder %s117, %s118
      %p130 = scmp.eq.s32.totalorder %s24, 1
      %p131 = por %p129, %p130
      %p133 = scmp.ne.s32.totalorder %s118, %s132
      %p134 = scmp.eq.s32.totalorder %s24, 0
      %p135 = por %p133, %p134
      %s137 = sadd.s32 %s136, 1
      %p140 = scmp.eq.s32.totalorder %s18, 1
      %p141 = scmp.ne.s32.totalorder %s136, %s138
      %p142 = scmp.eq.s32.totalorder %s18, 0
      %p143 = por %p141, %p142
      %p144 = scmp.ne.s32.totalorder %s136, %s138
      %p145 = scmp.eq.s32.totalorder %s23, 1
      %p146 = por %p144, %p145
      %p147 = scmp.ne.s32.totalorder %s138, %s139
      %p148 = scmp.eq.s32.totalorder %s23, 0
      %p149 = por %p147, %p148
      %p150 = scmp.ne.s32.totalorder %s138, %s139
      %p151 = scmp.eq.s32.totalorder %s24, 1
      %p152 = por %p150, %p151
      %p154 = scmp.ne.s32.totalorder %s139, %s153
      %p155 = scmp.eq.s32.totalorder %s24, 0
      %p156 = por %p154, %p155
      %s158 = sadd.s32 %s157, 1
      %p161 = scmp.eq.s32.totalorder %s18, 1
      %p162 = scmp.ne.s32.totalorder %s157, %s159
      %p163 = scmp.eq.s32.totalorder %s18, 0
      %p164 = por %p162, %p163
      %p165 = scmp.ne.s32.totalorder %s157, %s159
      %p166 = scmp.eq.s32.totalorder %s23, 1
      %p167 = por %p165, %p166
      %p168 = scmp.ne.s32.totalorder %s159, %s160
      %p169 = scmp.eq.s32.totalorder %s23, 0
      %p170 = por %p168, %p169
      %p171 = scmp.ne.s32.totalorder %s159, %s160
      %p172 = scmp.eq.s32.totalorder %s24, 1
      %p173 = por %p171, %p172
      %p175 = scmp.ne.s32.totalorder %s160, %s174
      %p176 = scmp.eq.s32.totalorder %s24, 0
      %p177 = por %p175, %p176
      %s179 = sadd.s32 %s178, 1
      %p182 = scmp.eq.s32.totalorder %s18, 1
      %p183 = scmp.ne.s32.totalorder %s178, %s180
      %p184 = scmp.eq.s32.totalorder %s18, 0
      %p185 = por %p183, %p184
      %p186 = scmp.ne.s32.totalorder %s178, %s180
      %p187 = scmp.eq.s32.totalorder %s23, 1
      %p188 = por %p186, %p187
      %p189 = scmp.ne.s32.totalorder %s180, %s181
      %p190 = scmp.eq.s32.totalorder %s23, 0
      %p191 = por %p189, %p190
      %p192 = scmp.ne.s32.totalorder %s180, %s181
      %p193 = scmp.eq.s32.totalorder %s24, 1
      %p194 = por %p192, %p193
      %p196 = scmp.ne.s32.totalorder %s181, %s195
      %p197 = scmp.eq.s32.totalorder %s24, 0
      %p198 = por %p196, %p197
      %s200 = sadd.s32 %s199, 1
      %p203 = scmp.eq.s32.totalorder %s18, 1
      %p204 = scmp.ne.s32.totalorder %s199, %s201
      %p205 = scmp.eq.s32.totalorder %s18, 0
      %p206 = por %p204, %p205
      %p207 = scmp.ne.s32.totalorder %s199, %s201
      %p208 = scmp.eq.s32.totalorder %s23, 1
      %p209 = por %p207, %p208
      %p210 = scmp.ne.s32.totalorder %s201, %s202
      %p211 = scmp.eq.s32.totalorder %s23, 0
      %p212 = por %p210, %p211
      %p213 = scmp.ne.s32.totalorder %s201, %s202
      %p214 = scmp.eq.s32.totalorder %s24, 1
      %p215 = por %p213, %p214
      %p217 = scmp.ne.s32.totalorder %s202, %s216
      %p218 = scmp.eq.s32.totalorder %s24, 0
      %p219 = por %p217, %p218
      %s220 = ssub.s32 %s18, %s25
      %p221 = scmp.eq.s32.totalorder %s220, 0
      %s223 = sadd.s32 %s222, 1
      %s224 = scalar_select %p221, %s222, %s223
      %p227 = pneg %p221
      %p228 = scmp.eq.s32.totalorder %s18, 1
      %p229 = por %p227, %p228
      %p230 = scmp.ne.s32.totalorder %s222, %s225
      %p231 = scmp.eq.s32.totalorder %s18, 0
      %p232 = por %p230, %p231
      %p233 = scmp.ne.s32.totalorder %s222, %s225
      %p234 = scmp.eq.s32.totalorder %s23, 1
      %p235 = por %p233, %p234
      %p236 = scmp.ne.s32.totalorder %s225, %s226
      %p237 = scmp.eq.s32.totalorder %s23, 0
      %p238 = por %p236, %p237
      %p239 = scmp.ne.s32.totalorder %s225, %s226
      %p240 = scmp.eq.s32.totalorder %s24, 1
      %p241 = por %p239, %p240
      %p243 = scmp.ne.s32.totalorder %s226, %s242
      %p244 = scmp.eq.s32.totalorder %s24, 0
      %p245 = por %p243, %p244
      %p246 = scmp.le.s32.totalorder 1, %s18
      %p247 = scmp.lt.s32.totalorder %s18, 3
      %p248 = pnand %p246, %p247
      %p249 = pneg %p248
      // Predicated region
      $region9: #{tpu_custom_call.1} parent=5 // pred_check
        _
      $region10: #{tpu_custom_call.1} parent=5 // pred_check_branch
        %251 = sbr.rel (%p248) target = $region12
      $region11: #{tpu_custom_call.1} parent=5 // pred_region
        %s252 = ssub.s32 %s18, 1
        // Predicated region
        $region13: #{tpu_custom_call.1} parent=11 // pred_check
          %p253 = pneg %p65
        $region14: #{tpu_custom_call.1} parent=11 // pred_check_branch
          %255 = sbr.rel (%p253) target = $region16
        $region15: #{tpu_custom_call.1} parent=11 // pred_region
          _
        $region16: #{tpu_custom_call.1} parent=11 // pred_fallthru
          _
        // Predicated region
        $region17: #{tpu_custom_call.1} parent=11 // pred_check
          %p256 = pneg %p86
        $region18: #{tpu_custom_call.1} parent=11 // pred_check_branch
          %258 = sbr.rel (%p256) target = $region20
        $region19: #{tpu_custom_call.1} parent=11 // pred_region
          _
        $region20: #{tpu_custom_call.1} parent=11 // pred_fallthru
          _
        // Predicated region
        $region21: #{tpu_custom_call.1} parent=11 // pred_check
          %p259 = pneg %p107
        $region22: #{tpu_custom_call.1} parent=11 // pred_check_branch
          %261 = sbr.rel (%p259) target = $region24
        $region23: #{tpu_custom_call.1} parent=11 // pred_region
          _
        $region24: #{tpu_custom_call.1} parent=11 // pred_fallthru
          _
        // Predicated region
        $region25: #{tpu_custom_call.1} parent=11 // pred_check
          %p262 = pneg %p128
        $region26: #{tpu_custom_call.1} parent=11 // pred_check_branch
          %264 = sbr.rel (%p262) target = $region28
        $region27: #{tpu_custom_call.1} parent=11 // pred_region
          _
        $region28: #{tpu_custom_call.1} parent=11 // pred_fallthru
          _
        // Predicated region
        $region29: #{tpu_custom_call.1} parent=11 // pred_check
          %p265 = pneg %p149
        $region30: #{tpu_custom_call.1} parent=11 // pred_check_branch
          %267 = sbr.rel (%p265) target = $region32
        $region31: #{tpu_custom_call.1} parent=11 // pred_region
          _
        $region32: #{tpu_custom_call.1} parent=11 // pred_fallthru
          _
        // Predicated region
        $region33: #{tpu_custom_call.1} parent=11 // pred_check
          %p268 = pneg %p170
        $region34: #{tpu_custom_call.1} parent=11 // pred_check_branch
          %270 = sbr.rel (%p268) target = $region36
        $region35: #{tpu_custom_call.1} parent=11 // pred_region
          _
        $region36: #{tpu_custom_call.1} parent=11 // pred_fallthru
          _
        // Predicated region
        $region37: #{tpu_custom_call.1} parent=11 // pred_check
          %p271 = pneg %p191
        $region38: #{tpu_custom_call.1} parent=11 // pred_check_branch
          %273 = sbr.rel (%p271) target = $region40
        $region39: #{tpu_custom_call.1} parent=11 // pred_region
          _
        $region40: #{tpu_custom_call.1} parent=11 // pred_fallthru
          _
        // Predicated region
        $region41: #{tpu_custom_call.1} parent=11 // pred_check
          %p274 = pneg %p212
        $region42: #{tpu_custom_call.1} parent=11 // pred_check_branch
          %276 = sbr.rel (%p274) target = $region44
        $region43: #{tpu_custom_call.1} parent=11 // pred_region
          _
        $region44: #{tpu_custom_call.1} parent=11 // pred_fallthru
          _
      $region12: #{tpu_custom_call.1} parent=5 // pred_fallthru
        _
      %p277 = scmp.lt.s32.totalorder %s18, 2
      // Predicated region
      $region45: #{tpu_custom_call.1} parent=5 // pred_check
        %p278 = pneg %p277
      $region46: #{tpu_custom_call.1} parent=5 // pred_check_branch
        %280 = sbr.rel (%p278) target = $region48
      $region47: #{tpu_custom_call.1} parent=5 // pred_region
        // Predicated region
        $region49: #{tpu_custom_call.1} parent=47 // pred_check
          %p281 = pneg %p38
        $region50: #{tpu_custom_call.1} parent=47 // pred_check_branch
          %283 = sbr.rel (%p281) target = $region52
        $region51: #{tpu_custom_call.1} parent=47 // pred_region
          %p284 = scmp.lt.s32.totalorder %s18, 1
          %s285 = scalar_select %p284, %s18, 1
          %s286 = smul.addr %s285, 2
          %s287 = smul.addr %s286, 8
          %s288 = scalar_lea.vmem %s0, %s287
        $region52: #{tpu_custom_call.1} parent=47 // pred_fallthru
          _
      $region48: #{tpu_custom_call.1} parent=5 // pred_fallthru
        _
      %p289 = scmp.le.s32.totalorder 1, %s18
      %p290 = scmp.lt.s32.totalorder %s18, 3
      %p291 = pnand %p289, %p290
      %p292 = pneg %p291
      // Predicated region
      $region53: #{tpu_custom_call.1} parent=5 // pred_check
        _
      $region54: #{tpu_custom_call.1} parent=5 // pred_check_branch
        %294 = sbr.rel (%p291) target = $region56
      $region55: #{tpu_custom_call.1} parent=5 // pred_region
        %s295 = ssub.s32 %s18, 1
        %p296 = scmp.lt.s32.totalorder %s23, 1
        %s297 = scalar_select %p296, %s23, 1
        %s298 = smul.addr %s297, 2
        %s299 = smul.addr %s298, 8
        %s300 = scalar_lea.vmem %s0, %s299
        %p301 = pneg %p44
        %p302 = pneg %p41
        %p303 = pneg %p65
        %p304 = pneg %p62
        %p305 = pneg %p86
        %p306 = pneg %p83
        %p307 = pneg %p107
        %p308 = pneg %p104
        %p309 = pneg %p128
        %p310 = pneg %p125
        %p311 = pneg %p149
        %p312 = pneg %p146
        %p313 = pneg %p170
        %p314 = pneg %p167
        %p315 = pneg %p191
        %p316 = pneg %p188
        %p317 = pneg %p212
        %p318 = pneg %p209
        %p319 = pneg %p238
        %p320 = pneg %p235
        %s321 = sand.u32 %s225, 1
        %s322 = scalar_lea.sflag [#allocation3], %s321
        %s323 = sand.u32 %s225, 1
        %s324 = smul.addr %s323, 8
        %s325 = scalar_lea.vmem [#allocation2], %s324
        %p326 = scmp.lt.s32.totalorder %s23, 1
        %s327 = scalar_select %p326, %s23, 1
        %s328 = smul.addr %s327, 2
        %s329 = smul.addr %s328, 8
        %s330 = scalar_lea.vmem %s0, %s329
        %v331 = vld [vmem:[%s330] sm:$0xff]
        %v332 = vld [vmem:[%s330 + $0x8] sm:$0xff]
        %v333 = vld [vmem:[%s2] sm:$0xff]
        %335 = vset.pattern.permute.xlu0 0
        %336 = vperm.xlu0 %335, %v333
        %v337 = vpop.permute.xlu0 %336
        %v339 = vmul.f32 %v331, %v337
        %v340 = vmul.f32 %v332, %v337
        %s341 = scalar_lea.vmem %s2, 8
        %v342 = vld [vmem:[%s341] sm:$0xff]
        %344 = vset.pattern.permute.xlu0 0
        %345 = vperm.xlu0 %344, %v342
        %v346 = vpop.permute.xlu0 %345
        %v348 = vadd.f32 %v339, %v346
        %v349 = vadd.f32 %v340, %v346
        %v350 = vmax.f32 %v348, 0.0
        %v351 = vmax.f32 %v349, 0.0
        %v352 = vld [vmem:[%s3] sm:$0xff]
        %v353 = vld [vmem:[%s4] sm:$0xff]
        %355 = vset.pattern.permute.xlu0 0
        %356 = vperm.xlu0 %355, %v353
        %v357 = vpop.permute.xlu0 %356
        %vm359 = vcmask 64512
        %v361 = vsel %vm359, %v352, 0
        %363 = vmatprep.subr.mxu0 %v351
        %364 = vmatpush1.msra.mxu0 %v350
        %365 = vmatprep.subr.mxu0 0.0
        %366 = vmatpush1.msra.mxu0 0.0
        %367 = vmatprep.subr.mxu0 0.0
        %368 = vmatpush1.msra.mxu0 0.0
        %369 = vmatprep.subr.mxu0 0.0
        %370 = vmatpush1.msra.mxu0 0.0
        %371 = vmatprep.subr.mxu0 0.0
        %372 = vmatpush1.msra.mxu0 0.0
        %373 = vmatprep.subr.mxu0 0.0
        %374 = vmatpush1.msra.mxu0 0.0
        %375 = vmatprep.subr.mxu0 0.0
        %376 = vmatpush1.msra.mxu0 0.0
        %377 = vmatprep.subr.mxu0 0.0
        %378 = vmatpush1.msra.mxu0 0.0
        %379 = vmatprep.subr.mxu0 0.0
        %380 = vmatpush1.msra.mxu0 0.0
        %381 = vmatprep.subr.mxu0 0.0
        %382 = vmatpush1.msra.mxu0 0.0
        %383 = vmatprep.subr.mxu0 0.0
        %384 = vmatpush1.msra.mxu0 0.0
        %385 = vmatprep.subr.mxu0 0.0
        %386 = vmatpush1.msra.mxu0 0.0
        %387 = vmatprep.subr.mxu0 0.0
        %388 = vmatpush1.msra.mxu0 0.0
        %389 = vmatprep.subr.mxu0 0.0
        %390 = vmatpush1.msra.mxu0 0.0
        %391 = vmatprep.subr.mxu0 0.0
        %392 = vmatpush1.msra.mxu0 0.0
        %393 = vmatprep.subr.mxu0 0.0
        %394 = vmatpush1.msra.mxu0 0.0
        %395 = vmatprep.subr.mxu0 0.0
        %396 = vmatpush1.msra.mxu0 0.0
        %397 = vmatprep.subr.mxu0 0.0
        %398 = vmatpush1.msra.mxu0 0.0
        %399 = vmatprep.subr.mxu0 0.0
        %400 = vmatpush1.msra.mxu0 0.0
        %401 = vmatprep.subr.mxu0 0.0
        %402 = vmatpush1.msra.mxu0 0.0
        %403 = vmatprep.subr.mxu0 0.0
        %404 = vmatpush1.msra.mxu0 0.0
        %405 = vmatprep.subr.mxu0 0.0
        %406 = vmatpush1.msra.mxu0 0.0
        %407 = vmatprep.subr.mxu0 0.0
        %408 = vmatpush1.msra.mxu0 0.0
        %409 = vmatprep.subr.mxu0 0.0
        %410 = vmatpush1.msra.mxu0 0.0
        %411 = vmatprep.subr.mxu0 0.0
        %412 = vmatpush1.msra.mxu0 0.0
        %413 = vmatprep.subr.mxu0 0.0
        %414 = vmatpush1.msra.mxu0 0.0
        %415 = vmatprep.subr.mxu0 0.0
        %416 = vmatpush1.msra.mxu0 0.0
        %417 = vmatprep.subr.mxu0 0.0
        %418 = vmatpush1.msra.mxu0 0.0
        %419 = vmatprep.subr.mxu0 0.0
        %420 = vmatpush1.msra.mxu0 0.0
        %421 = vmatprep.subr.mxu0 0.0
        %422 = vmatpush1.msra.mxu0 0.0
        %423 = vmatprep.subr.mxu0 0.0
        %424 = vmatpush1.msra.mxu0 0.0
        %425 = vmatprep.subr.mxu0 0.0
        %426 = vmatpush1.msra.mxu0 0.0
        %427 = vmatprep.mubr.f32.mxu0 0.0
        %428 = vmatmul.mubr.f32.gmra.mrb[0].mxu0 %v361
        %v429 = vpop.f32.mrb[0].mxu0
        %v430 = vadd.f32 %v357, %v429
        %v431 = vpop.f32.mrb[0].mxu0
        %v432 = vadd.f32 %v357, %v431
        %433 = vdwg.mxu0
        %v434 = vmax.f32 %v430, 0.0
        %v435 = vmax.f32 %v432, 0.0
        %436 = vrot.lane.b32.xlu0 %v434, 17
        %v437 = vpop.permute.xlu0 %436
        %438 = vrot.lane.b32.xlu0 %v435, 17
        %v439 = vpop.permute.xlu0 %438
        %v440 = vlaneseq
        %v441 = vand.u32 %v440, 127
        %vm442 = vcmp.lt.s32.totalorder %v441, 17
        %v443 = vsel %vm442, %v437, %v439
        %v444 = vsel %vm442, %v439, %v437
        %v445 = vld [vmem:[%s1] sm:$0x3]
        %v447 = vlaneseq
        %v448 = vshrl.u32 %v447, 7
        %v449 = vsub.s32 0, %v448
        %v450 = vrot.slane %v445, %v449
        %v451 = vlaneseq
        %v452 = vshrl.u32 %v451, 7
        %v453 = vsub.s32 1, %v452
        %v454 = vrot.slane %v445, %v453
        %v457 = vmul.f32 %v444, %v450
        %v458 = vmul.f32 %v443, %v454
        %v459 = vld [vmem:[%s5] sm:$0xff]
        %460 = vrot.lane.b32.xlu0 %v434, 16
        %v461 = vpop.permute.xlu0 %460
        %462 = vrot.lane.b32.xlu0 %v435, 16
        %v463 = vpop.permute.xlu0 %462
        %vm464 = vcmp.lt.s32.totalorder %v441, 16
        %v465 = vsel %vm464, %v461, %v463
        %v466 = vsel %vm464, %v463, %v461
        %s467 = scalar_lea.vmem %s1, 2
        %v468 = vld [vmem:[%s467] sm:$0x3]
        %v470 = vlaneseq
        %v471 = vshrl.u32 %v470, 7
        %v472 = vsub.s32 0, %v471
        %v473 = vrot.slane %v468, %v472
        %v474 = vlaneseq
        %v475 = vshrl.u32 %v474, 7
        %v476 = vsub.s32 1, %v475
        %v477 = vrot.slane %v468, %v476
        %v480 = vmul.f32 %v466, %v473
        %v481 = vmul.f32 %v465, %v477
        %s482 = scalar_lea.vmem %s5, 8
        %v483 = vld [vmem:[%s482] sm:$0xff]
        %v485 = vsel %vm359, %v483, 0
        %487 = vmatprep.subr.mxu0 %v481
        %488 = vmatpush1.msra.mxu0 %v480
        %489 = vmatprep.subr.mxu0 0.0
        %490 = vmatpush1.msra.mxu0 0.0
        %491 = vmatprep.subr.mxu0 0.0
        %492 = vmatpush1.msra.mxu0 0.0
        %493 = vmatprep.subr.mxu0 0.0
        %494 = vmatpush1.msra.mxu0 0.0
        %495 = vmatprep.subr.mxu0 0.0
        %496 = vmatpush1.msra.mxu0 0.0
        %497 = vmatprep.subr.mxu0 0.0
        %498 = vmatpush1.msra.mxu0 0.0
        %499 = vmatprep.subr.mxu0 0.0
        %500 = vmatpush1.msra.mxu0 0.0
        %501 = vmatprep.subr.mxu0 0.0
        %502 = vmatpush1.msra.mxu0 0.0
        %503 = vmatprep.subr.mxu0 0.0
        %504 = vmatpush1.msra.mxu0 0.0
        %505 = vmatprep.subr.mxu0 0.0
        %506 = vmatpush1.msra.mxu0 0.0
        %507 = vmatprep.subr.mxu0 0.0
        %508 = vmatpush1.msra.mxu0 0.0
        %509 = vmatprep.subr.mxu0 0.0
        %510 = vmatpush1.msra.mxu0 0.0
        %511 = vmatprep.subr.mxu0 0.0
        %512 = vmatpush1.msra.mxu0 0.0
        %513 = vmatprep.subr.mxu0 0.0
        %514 = vmatpush1.msra.mxu0 0.0
        %515 = vmatprep.subr.mxu0 0.0
        %516 = vmatpush1.msra.mxu0 0.0
        %517 = vmatprep.subr.mxu0 0.0
        %518 = vmatpush1.msra.mxu0 0.0
        %519 = vmatprep.subr.mxu0 0.0
        %520 = vmatpush1.msra.mxu0 0.0
        %521 = vmatprep.subr.mxu0 0.0
        %522 = vmatpush1.msra.mxu0 0.0
        %523 = vmatprep.subr.mxu0 0.0
        %524 = vmatpush1.msra.mxu0 0.0
        %525 = vmatprep.subr.mxu0 0.0
        %526 = vmatpush1.msra.mxu0 0.0
        %527 = vmatprep.subr.mxu0 0.0
        %528 = vmatpush1.msra.mxu0 0.0
        %529 = vmatprep.subr.mxu0 0.0
        %530 = vmatpush1.msra.mxu0 0.0
        %531 = vmatprep.subr.mxu0 0.0
        %532 = vmatpush1.msra.mxu0 0.0
        %533 = vmatprep.subr.mxu0 0.0
        %534 = vmatpush1.msra.mxu0 0.0
        %535 = vmatprep.subr.mxu0 0.0
        %536 = vmatpush1.msra.mxu0 0.0
        %537 = vmatprep.subr.mxu0 0.0
        %538 = vmatpush1.msra.mxu0 0.0
        %539 = vmatprep.subr.mxu0 0.0
        %540 = vmatpush1.msra.mxu0 0.0
        %541 = vmatprep.subr.mxu0 0.0
        %542 = vmatpush1.msra.mxu0 0.0
        %543 = vmatprep.subr.mxu0 0.0
        %544 = vmatpush1.msra.mxu0 0.0
        %545 = vmatprep.subr.mxu0 0.0
        %546 = vmatpush1.msra.mxu0 0.0
        %547 = vmatprep.subr.mxu0 0.0
        %548 = vmatpush1.msra.mxu0 0.0
        %549 = vmatprep.subr.mxu0 0.0
        %550 = vmatpush1.msra.mxu0 0.0
        %551 = vmatprep.mubr.f32.mxu0 0.0
        %552 = vmatmul.mubr.f32.gmra.mrb[0].mxu0 %v485
        %v553 = vpop.f32.mrb[0].mxu0
        %v554 = vadd.f32 0.0, %v553
        %v555 = vpop.f32.mrb[0].mxu0
        %v556 = vadd.f32 0.0, %v555
        %557 = vdwg.mxu0
        %v559 = vsel %vm359, %v459, 0
        %561 = vmatprep.subr.mxu0 %v458
        %562 = vmatpush1.msra.mxu0 %v457
        %563 = vmatprep.subr.mxu0 0.0
        %564 = vmatpush1.msra.mxu0 0.0
        %565 = vmatprep.subr.mxu0 0.0
        %566 = vmatpush1.msra.mxu0 0.0
        %567 = vmatprep.subr.mxu0 0.0
        %568 = vmatpush1.msra.mxu0 0.0
        %569 = vmatprep.subr.mxu0 0.0
        %570 = vmatpush1.msra.mxu0 0.0
        %571 = vmatprep.subr.mxu0 0.0
        %572 = vmatpush1.msra.mxu0 0.0
        %573 = vmatprep.subr.mxu0 0.0
        %574 = vmatpush1.msra.mxu0 0.0
        %575 = vmatprep.subr.mxu0 0.0
        %576 = vmatpush1.msra.mxu0 0.0
        %577 = vmatprep.subr.mxu0 0.0
        %578 = vmatpush1.msra.mxu0 0.0
        %579 = vmatprep.subr.mxu0 0.0
        %580 = vmatpush1.msra.mxu0 0.0
        %581 = vmatprep.subr.mxu0 0.0
        %582 = vmatpush1.msra.mxu0 0.0
        %583 = vmatprep.subr.mxu0 0.0
        %584 = vmatpush1.msra.mxu0 0.0
        %585 = vmatprep.subr.mxu0 0.0
        %586 = vmatpush1.msra.mxu0 0.0
        %587 = vmatprep.subr.mxu0 0.0
        %588 = vmatpush1.msra.mxu0 0.0
        %589 = vmatprep.subr.mxu0 0.0
        %590 = vmatpush1.msra.mxu0 0.0
        %591 = vmatprep.subr.mxu0 0.0
        %592 = vmatpush1.msra.mxu0 0.0
        %593 = vmatprep.subr.mxu0 0.0
        %594 = vmatpush1.msra.mxu0 0.0
        %595 = vmatprep.subr.mxu0 0.0
        %596 = vmatpush1.msra.mxu0 0.0
        %597 = vmatprep.subr.mxu0 0.0
        %598 = vmatpush1.msra.mxu0 0.0
        %599 = vmatprep.subr.mxu0 0.0
        %600 = vmatpush1.msra.mxu0 0.0
        %601 = vmatprep.subr.mxu0 0.0
        %602 = vmatpush1.msra.mxu0 0.0
        %603 = vmatprep.subr.mxu0 0.0
        %604 = vmatpush1.msra.mxu0 0.0
        %605 = vmatprep.subr.mxu0 0.0
        %606 = vmatpush1.msra.mxu0 0.0
        %607 = vmatprep.subr.mxu0 0.0
        %608 = vmatpush1.msra.mxu0 0.0
        %609 = vmatprep.subr.mxu0 0.0
        %610 = vmatpush1.msra.mxu0 0.0
        %611 = vmatprep.subr.mxu0 0.0
        %612 = vmatpush1.msra.mxu0 0.0
        %613 = vmatprep.subr.mxu0 0.0
        %614 = vmatpush1.msra.mxu0 0.0
        %615 = vmatprep.subr.mxu0 0.0
        %616 = vmatpush1.msra.mxu0 0.0
        %617 = vmatprep.subr.mxu0 0.0
        %618 = vmatpush1.msra.mxu0 0.0
        %619 = vmatprep.subr.mxu0 0.0
        %620 = vmatpush1.msra.mxu0 0.0
        %621 = vmatprep.subr.mxu0 0.0
        %622 = vmatpush1.msra.mxu0 0.0
        %623 = vmatprep.subr.mxu0 0.0
        %624 = vmatpush1.msra.mxu0 0.0
        %625 = vmatprep.mubr.f32.mxu0 0.0
        %626 = vmatmul.mubr.f32.gmra.mrb[0].mxu0 %v559
        %v627 = vpop.f32.mrb[0].mxu0
        %v628 = vadd.f32 %v554, %v627
        %v629 = vpop.f32.mrb[0].mxu0
        %v630 = vadd.f32 %v556, %v629
        %631 = vdwg.mxu0
        %632 = vrot.lane.b32.xlu0 %v434, 15
        %v633 = vpop.permute.xlu0 %632
        %634 = vrot.lane.b32.xlu0 %v435, 15
        %v635 = vpop.permute.xlu0 %634
        %vm636 = vcmp.lt.s32.totalorder %v441, 15
        %v637 = vsel %vm636, %v633, %v635
        %v638 = vsel %vm636, %v635, %v633
        %s639 = scalar_lea.vmem %s1, 4
        %v640 = vld [vmem:[%s639] sm:$0x3]
        %v642 = vlaneseq
        %v643 = vshrl.u32 %v642, 7
        %v644 = vsub.s32 0, %v643
        %v645 = vrot.slane %v640, %v644
        %v646 = vlaneseq
        %v647 = vshrl.u32 %v646, 7
        %v648 = vsub.s32 1, %v647
        %v649 = vrot.slane %v640, %v648
        %v652 = vmul.f32 %v638, %v645
        %v653 = vmul.f32 %v637, %v649
        %s654 = scalar_lea.vmem %s5, 16
        %v655 = vld [vmem:[%s654] sm:$0xff]
        %v657 = vsel %vm359, %v655, 0
        %659 = vmatprep.subr.mxu0 %v653
        %660 = vmatpush1.msra.mxu0 %v652
        %661 = vmatprep.subr.mxu0 0.0
        %662 = vmatpush1.msra.mxu0 0.0
        %663 = vmatprep.subr.mxu0 0.0
        %664 = vmatpush1.msra.mxu0 0.0
        %665 = vmatprep.subr.mxu0 0.0
        %666 = vmatpush1.msra.mxu0 0.0
        %667 = vmatprep.subr.mxu0 0.0
        %668 = vmatpush1.msra.mxu0 0.0
        %669 = vmatprep.subr.mxu0 0.0
        %670 = vmatpush1.msra.mxu0 0.0
        %671 = vmatprep.subr.mxu0 0.0
        %672 = vmatpush1.msra.mxu0 0.0
        %673 = vmatprep.subr.mxu0 0.0
        %674 = vmatpush1.msra.mxu0 0.0
        %675 = vmatprep.subr.mxu0 0.0
        %676 = vmatpush1.msra.mxu0 0.0
        %677 = vmatprep.subr.mxu0 0.0
        %678 = vmatpush1.msra.mxu0 0.0
        %679 = vmatprep.subr.mxu0 0.0
        %680 = vmatpush1.msra.mxu0 0.0
        %681 = vmatprep.subr.mxu0 0.0
        %682 = vmatpush1.msra.mxu0 0.0
        %683 = vmatprep.subr.mxu0 0.0
        %684 = vmatpush1.msra.mxu0 0.0
        %685 = vmatprep.subr.mxu0 0.0
        %686 = vmatpush1.msra.mxu0 0.0
        %687 = vmatprep.subr.mxu0 0.0
        %688 = vmatpush1.msra.mxu0 0.0
        %689 = vmatprep.subr.mxu0 0.0
        %690 = vmatpush1.msra.mxu0 0.0
        %691 = vmatprep.subr.mxu0 0.0
        %692 = vmatpush1.msra.mxu0 0.0
        %693 = vmatprep.subr.mxu0 0.0
        %694 = vmatpush1.msra.mxu0 0.0
        %695 = vmatprep.subr.mxu0 0.0
        %696 = vmatpush1.msra.mxu0 0.0
        %697 = vmatprep.subr.mxu0 0.0
        %698 = vmatpush1.msra.mxu0 0.0
        %699 = vmatprep.subr.mxu0 0.0
        %700 = vmatpush1.msra.mxu0 0.0
        %701 = vmatprep.subr.mxu0 0.0
        %702 = vmatpush1.msra.mxu0 0.0
        %703 = vmatprep.subr.mxu0 0.0
        %704 = vmatpush1.msra.mxu0 0.0
        %705 = vmatprep.subr.mxu0 0.0
        %706 = vmatpush1.msra.mxu0 0.0
        %707 = vmatprep.subr.mxu0 0.0
        %708 = vmatpush1.msra.mxu0 0.0
        %709 = vmatprep.subr.mxu0 0.0
        %710 = vmatpush1.msra.mxu0 0.0
        %711 = vmatprep.subr.mxu0 0.0
        %712 = vmatpush1.msra.mxu0 0.0
        %713 = vmatprep.subr.mxu0 0.0
        %714 = vmatpush1.msra.mxu0 0.0
        %715 = vmatprep.subr.mxu0 0.0
        %716 = vmatpush1.msra.mxu0 0.0
        %717 = vmatprep.subr.mxu0 0.0
        %718 = vmatpush1.msra.mxu0 0.0
        %719 = vmatprep.subr.mxu0 0.0
        %720 = vmatpush1.msra.mxu0 0.0
        %721 = vmatprep.subr.mxu0 0.0
        %722 = vmatpush1.msra.mxu0 0.0
        %723 = vmatprep.mubr.f32.mxu0 0.0
        %724 = vmatmul.mubr.f32.gmra.mrb[0].mxu0 %v657
        %v725 = vpop.f32.mrb[0].mxu0
        %v726 = vadd.f32 0.0, %v725
        %v727 = vpop.f32.mrb[0].mxu0
        %v728 = vadd.f32 0.0, %v727
        %729 = vdwg.mxu0
        %v730 = vadd.f32 %v628, %v726
        %v731 = vadd.f32 %v630, %v728
        %732 = vrot.lane.b32.xlu0 %v434, 1
        %v733 = vpop.permute.xlu0 %732
        %734 = vrot.lane.b32.xlu0 %v435, 1
        %v735 = vpop.permute.xlu0 %734
        %vm736 = vcmp.lt.s32.totalorder %v441, 1
        %v737 = vsel %vm736, %v733, %v735
        %v738 = vsel %vm736, %v735, %v733
        %s739 = scalar_lea.vmem %s1, 6
        %v740 = vld [vmem:[%s739] sm:$0x3]
        %v742 = vlaneseq
        %v743 = vshrl.u32 %v742, 7
        %v744 = vsub.s32 0, %v743
        %v745 = vrot.slane %v740, %v744
        %v746 = vlaneseq
        %v747 = vshrl.u32 %v746, 7
        %v748 = vsub.s32 1, %v747
        %v749 = vrot.slane %v740, %v748
        %v752 = vmul.f32 %v738, %v745
        %v753 = vmul.f32 %v737, %v749
        %s754 = scalar_lea.vmem %s5, 24
        %v755 = vld [vmem:[%s754] sm:$0xff]
        %v757 = vsel %vm359, %v755, 0
        %759 = vmatprep.subr.mxu0 %v753
        %760 = vmatpush1.msra.mxu0 %v752
        %761 = vmatprep.subr.mxu0 0.0
        %762 = vmatpush1.msra.mxu0 0.0
        %763 = vmatprep.subr.mxu0 0.0
        %764 = vmatpush1.msra.mxu0 0.0
        %765 = vmatprep.subr.mxu0 0.0
        %766 = vmatpush1.msra.mxu0 0.0
        %767 = vmatprep.subr.mxu0 0.0
        %768 = vmatpush1.msra.mxu0 0.0
        %769 = vmatprep.subr.mxu0 0.0
        %770 = vmatpush1.msra.mxu0 0.0
        %771 = vmatprep.subr.mxu0 0.0
        %772 = vmatpush1.msra.mxu0 0.0
        %773 = vmatprep.subr.mxu0 0.0
        %774 = vmatpush1.msra.mxu0 0.0
        %775 = vmatprep.subr.mxu0 0.0
        %776 = vmatpush1.msra.mxu0 0.0
        %777 = vmatprep.subr.mxu0 0.0
        %778 = vmatpush1.msra.mxu0 0.0
        %779 = vmatprep.subr.mxu0 0.0
        %780 = vmatpush1.msra.mxu0 0.0
        %781 = vmatprep.subr.mxu0 0.0
        %782 = vmatpush1.msra.mxu0 0.0
        %783 = vmatprep.subr.mxu0 0.0
        %784 = vmatpush1.msra.mxu0 0.0
        %785 = vmatprep.subr.mxu0 0.0
        %786 = vmatpush1.msra.mxu0 0.0
        %787 = vmatprep.subr.mxu0 0.0
        %788 = vmatpush1.msra.mxu0 0.0
        %789 = vmatprep.subr.mxu0 0.0
        %790 = vmatpush1.msra.mxu0 0.0
        %791 = vmatprep.subr.mxu0 0.0
        %792 = vmatpush1.msra.mxu0 0.0
        %793 = vmatprep.subr.mxu0 0.0
        %794 = vmatpush1.msra.mxu0 0.0
        %795 = vmatprep.subr.mxu0 0.0
        %796 = vmatpush1.msra.mxu0 0.0
        %797 = vmatprep.subr.mxu0 0.0
        %798 = vmatpush1.msra.mxu0 0.0
        %799 = vmatprep.subr.mxu0 0.0
        %800 = vmatpush1.msra.mxu0 0.0
        %801 = vmatprep.subr.mxu0 0.0
        %802 = vmatpush1.msra.mxu0 0.0
        %803 = vmatprep.subr.mxu0 0.0
        %804 = vmatpush1.msra.mxu0 0.0
        %805 = vmatprep.subr.mxu0 0.0
        %806 = vmatpush1.msra.mxu0 0.0
        %807 = vmatprep.subr.mxu0 0.0
        %808 = vmatpush1.msra.mxu0 0.0
        %809 = vmatprep.subr.mxu0 0.0
        %810 = vmatpush1.msra.mxu0 0.0
        %811 = vmatprep.subr.mxu0 0.0
        %812 = vmatpush1.msra.mxu0 0.0
        %813 = vmatprep.subr.mxu0 0.0
        %814 = vmatpush1.msra.mxu0 0.0
        %815 = vmatprep.subr.mxu0 0.0
        %816 = vmatpush1.msra.mxu0 0.0
        %817 = vmatprep.subr.mxu0 0.0
        %818 = vmatpush1.msra.mxu0 0.0
        %819 = vmatprep.subr.mxu0 0.0
        %820 = vmatpush1.msra.mxu0 0.0
        %821 = vmatprep.subr.mxu0 0.0
        %822 = vmatpush1.msra.mxu0 0.0
        %823 = vmatprep.mubr.f32.mxu0 0.0
        %824 = vmatmul.mubr.f32.gmra.mrb[0].mxu0 %v757
        %v825 = vpop.f32.mrb[0].mxu0
        %v826 = vadd.f32 0.0, %v825
        %v827 = vpop.f32.mrb[0].mxu0
        %v828 = vadd.f32 0.0, %v827
        %829 = vdwg.mxu0
        %v830 = vadd.f32 %v730, %v826
        %v831 = vadd.f32 %v731, %v828
        %s832 = scalar_lea.vmem %s5, 32
        %v833 = vld [vmem:[%s832] sm:$0xff]
        %v835 = vsel %vm359, %v833, 0
        %837 = vmatprep.subr.mxu0 %v435
        %838 = vmatpush1.msra.mxu0 %v434
        %839 = vmatprep.subr.mxu0 0.0
        %840 = vmatpush1.msra.mxu0 0.0
        %841 = vmatprep.subr.mxu0 0.0
        %842 = vmatpush1.msra.mxu0 0.0
        %843 = vmatprep.subr.mxu0 0.0
        %844 = vmatpush1.msra.mxu0 0.0
        %845 = vmatprep.subr.mxu0 0.0
        %846 = vmatpush1.msra.mxu0 0.0
        %847 = vmatprep.subr.mxu0 0.0
        %848 = vmatpush1.msra.mxu0 0.0
        %849 = vmatprep.subr.mxu0 0.0
        %850 = vmatpush1.msra.mxu0 0.0
        %851 = vmatprep.subr.mxu0 0.0
        %852 = vmatpush1.msra.mxu0 0.0
        %853 = vmatprep.subr.mxu0 0.0
        %854 = vmatpush1.msra.mxu0 0.0
        %855 = vmatprep.subr.mxu0 0.0
        %856 = vmatpush1.msra.mxu0 0.0
        %857 = vmatprep.subr.mxu0 0.0
        %858 = vmatpush1.msra.mxu0 0.0
        %859 = vmatprep.subr.mxu0 0.0
        %860 = vmatpush1.msra.mxu0 0.0
        %861 = vmatprep.subr.mxu0 0.0
        %862 = vmatpush1.msra.mxu0 0.0
        %863 = vmatprep.subr.mxu0 0.0
        %864 = vmatpush1.msra.mxu0 0.0
        %865 = vmatprep.subr.mxu0 0.0
        %866 = vmatpush1.msra.mxu0 0.0
        %867 = vmatprep.subr.mxu0 0.0
        %868 = vmatpush1.msra.mxu0 0.0
        %869 = vmatprep.subr.mxu0 0.0
        %870 = vmatpush1.msra.mxu0 0.0
        %871 = vmatprep.subr.mxu0 0.0
        %872 = vmatpush1.msra.mxu0 0.0
        %873 = vmatprep.subr.mxu0 0.0
        %874 = vmatpush1.msra.mxu0 0.0
        %875 = vmatprep.subr.mxu0 0.0
        %876 = vmatpush1.msra.mxu0 0.0
        %877 = vmatprep.subr.mxu0 0.0
        %878 = vmatpush1.msra.mxu0 0.0
        %879 = vmatprep.subr.mxu0 0.0
        %880 = vmatpush1.msra.mxu0 0.0
        %881 = vmatprep.subr.mxu0 0.0
        %882 = vmatpush1.msra.mxu0 0.0
        %883 = vmatprep.subr.mxu0 0.0
        %884 = vmatpush1.msra.mxu0 0.0
        %885 = vmatprep.subr.mxu0 0.0
        %886 = vmatpush1.msra.mxu0 0.0
        %887 = vmatprep.subr.mxu0 0.0
        %888 = vmatpush1.msra.mxu0 0.0
        %889 = vmatprep.subr.mxu0 0.0
        %890 = vmatpush1.msra.mxu0 0.0
        %891 = vmatprep.subr.mxu0 0.0
        %892 = vmatpush1.msra.mxu0 0.0
        %893 = vmatprep.subr.mxu0 0.0
        %894 = vmatpush1.msra.mxu0 0.0
        %895 = vmatprep.subr.mxu0 0.0
        %896 = vmatpush1.msra.mxu0 0.0
        %897 = vmatprep.subr.mxu0 0.0
        %898 = vmatpush1.msra.mxu0 0.0
        %899 = vmatprep.subr.mxu0 0.0
        %900 = vmatpush1.msra.mxu0 0.0
        %901 = vmatprep.mubr.f32.mxu0 0.0
        %902 = vmatmul.mubr.f32.gmra.mrb[0].mxu0 %v835
        %v903 = vpop.f32.mrb[0].mxu0
        %v904 = vadd.f32 0.0, %v903
        %v905 = vpop.f32.mrb[0].mxu0
        %v906 = vadd.f32 0.0, %v905
        %907 = vdwg.mxu0
        %v908 = vadd.f32 %v830, %v904
        %v909 = vadd.f32 %v831, %v906
        %910 = vrot.lane.b32.xlu0 %v434, 127
        %v911 = vpop.permute.xlu0 %910
        %912 = vrot.lane.b32.xlu0 %v435, 127
        %v913 = vpop.permute.xlu0 %912
        %vm914 = vcmp.lt.s32.totalorder %v441, 127
        %v915 = vsel %vm914, %v911, %v913
        %v916 = vsel %vm914, %v913, %v911
        %s917 = scalar_lea.vmem %s1, 10
        %v918 = vld [vmem:[%s917] sm:$0x3]
        %v920 = vlaneseq
        %v921 = vshrl.u32 %v920, 7
        %v922 = vsub.s32 0, %v921
        %v923 = vrot.slane %v918, %v922
        %v924 = vlaneseq
        %v925 = vshrl.u32 %v924, 7
        %v926 = vsub.s32 1, %v925
        %v927 = vrot.slane %v918, %v926
        %v930 = vmul.f32 %v915, %v923
        %v931 = vmul.f32 %v916, %v927
        %s932 = scalar_lea.vmem %s5, 40
        %v933 = vld [vmem:[%s932] sm:$0xff]
        %v935 = vsel %vm359, %v933, 0
        %937 = vmatprep.subr.mxu0 %v931
        %938 = vmatpush1.msra.mxu0 %v930
        %939 = vmatprep.subr.mxu0 0.0
        %940 = vmatpush1.msra.mxu0 0.0
        %941 = vmatprep.subr.mxu0 0.0
        %942 = vmatpush1.msra.mxu0 0.0
        %943 = vmatprep.subr.mxu0 0.0
        %944 = vmatpush1.msra.mxu0 0.0
        %945 = vmatprep.subr.mxu0 0.0
        %946 = vmatpush1.msra.mxu0 0.0
        %947 = vmatprep.subr.mxu0 0.0
        %948 = vmatpush1.msra.mxu0 0.0
        %949 = vmatprep.subr.mxu0 0.0
        %950 = vmatpush1.msra.mxu0 0.0
        %951 = vmatprep.subr.mxu0 0.0
        %952 = vmatpush1.msra.mxu0 0.0
        %953 = vmatprep.subr.mxu0 0.0
        %954 = vmatpush1.msra.mxu0 0.0
        %955 = vmatprep.subr.mxu0 0.0
        %956 = vmatpush1.msra.mxu0 0.0
        %957 = vmatprep.subr.mxu0 0.0
        %958 = vmatpush1.msra.mxu0 0.0
        %959 = vmatprep.subr.mxu0 0.0
        %960 = vmatpush1.msra.mxu0 0.0
        %961 = vmatprep.subr.mxu0 0.0
        %962 = vmatpush1.msra.mxu0 0.0
        %963 = vmatprep.subr.mxu0 0.0
        %964 = vmatpush1.msra.mxu0 0.0
        %965 = vmatprep.subr.mxu0 0.0
        %966 = vmatpush1.msra.mxu0 0.0
        %967 = vmatprep.subr.mxu0 0.0
        %968 = vmatpush1.msra.mxu0 0.0
        %969 = vmatprep.subr.mxu0 0.0
        %970 = vmatpush1.msra.mxu0 0.0
        %971 = vmatprep.subr.mxu0 0.0
        %972 = vmatpush1.msra.mxu0 0.0
        %973 = vmatprep.subr.mxu0 0.0
        %974 = vmatpush1.msra.mxu0 0.0
        %975 = vmatprep.subr.mxu0 0.0
        %976 = vmatpush1.msra.mxu0 0.0
        %977 = vmatprep.subr.mxu0 0.0
        %978 = vmatpush1.msra.mxu0 0.0
        %979 = vmatprep.subr.mxu0 0.0
        %980 = vmatpush1.msra.mxu0 0.0
        %981 = vmatprep.subr.mxu0 0.0
        %982 = vmatpush1.msra.mxu0 0.0
        %983 = vmatprep.subr.mxu0 0.0
        %984 = vmatpush1.msra.mxu0 0.0
        %985 = vmatprep.subr.mxu0 0.0
        %986 = vmatpush1.msra.mxu0 0.0
        %987 = vmatprep.subr.mxu0 0.0
        %988 = vmatpush1.msra.mxu0 0.0
        %989 = vmatprep.subr.mxu0 0.0
        %990 = vmatpush1.msra.mxu0 0.0
        %991 = vmatprep.subr.mxu0 0.0
        %992 = vmatpush1.msra.mxu0 0.0
        %993 = vmatprep.subr.mxu0 0.0
        %994 = vmatpush1.msra.mxu0 0.0
        %995 = vmatprep.subr.mxu0 0.0
        %996 = vmatpush1.msra.mxu0 0.0
        %997 = vmatprep.subr.mxu0 0.0
        %998 = vmatpush1.msra.mxu0 0.0
        %999 = vmatprep.subr.mxu0 0.0
        %1000 = vmatpush1.msra.mxu0 0.0
        %1001 = vmatprep.mubr.f32.mxu0 0.0
        %1002 = vmatmul.mubr.f32.gmra.mrb[0].mxu0 %v935
        %v1003 = vpop.f32.mrb[0].mxu0
        %v1004 = vadd.f32 0.0, %v1003
        %v1005 = vpop.f32.mrb[0].mxu0
        %v1006 = vadd.f32 0.0, %v1005
        %1007 = vdwg.mxu0
        %v1008 = vadd.f32 %v908, %v1004
        %v1009 = vadd.f32 %v909, %v1006
        %1010 = vrot.lane.b32.xlu0 %v434, 113
        %v1011 = vpop.permute.xlu0 %1010
        %1012 = vrot.lane.b32.xlu0 %v435, 113
        %v1013 = vpop.permute.xlu0 %1012
        %vm1014 = vcmp.lt.s32.totalorder %v441, 113
        %v1015 = vsel %vm1014, %v1011, %v1013
        %v1016 = vsel %vm1014, %v1013, %v1011
        %s1017 = scalar_lea.vmem %s1, 12
        %v1018 = vld [vmem:[%s1017] sm:$0x3]
        %v1020 = vlaneseq
        %v1021 = vshrl.u32 %v1020, 7
        %v1022 = vsub.s32 0, %v1021
        %v1023 = vrot.slane %v1018, %v1022
        %v1024 = vlaneseq
        %v1025 = vshrl.u32 %v1024, 7
        %v1026 = vsub.s32 1, %v1025
        %v1027 = vrot.slane %v1018, %v1026
        %v1030 = vmul.f32 %v1015, %v1023
        %v1031 = vmul.f32 %v1016, %v1027
        %s1032 = scalar_lea.vmem %s5, 48
        %v1033 = vld [vmem:[%s1032] sm:$0xff]
        %v1035 = vsel %vm359, %v1033, 0
        %1037 = vmatprep.subr.mxu0 %v1031
        %1038 = vmatpush1.msra.mxu0 %v1030
        %1039 = vmatprep.subr.mxu0 0.0
        %1040 = vmatpush1.msra.mxu0 0.0
        %1041 = vmatprep.subr.mxu0 0.0
        %1042 = vmatpush1.msra.mxu0 0.0
        %1043 = vmatprep.subr.mxu0 0.0
        %1044 = vmatpush1.msra.mxu0 0.0
        %1045 = vmatprep.subr.mxu0 0.0
        %1046 = vmatpush1.msra.mxu0 0.0
        %1047 = vmatprep.subr.mxu0 0.0
        %1048 = vmatpush1.msra.mxu0 0.0
        %1049 = vmatprep.subr.mxu0 0.0
        %1050 = vmatpush1.msra.mxu0 0.0
        %1051 = vmatprep.subr.mxu0 0.0
        %1052 = vmatpush1.msra.mxu0 0.0
        %1053 = vmatprep.subr.mxu0 0.0
        %1054 = vmatpush1.msra.mxu0 0.0
        %1055 = vmatprep.subr.mxu0 0.0
        %1056 = vmatpush1.msra.mxu0 0.0
        %1057 = vmatprep.subr.mxu0 0.0
        %1058 = vmatpush1.msra.mxu0 0.0
        %1059 = vmatprep.subr.mxu0 0.0
        %1060 = vmatpush1.msra.mxu0 0.0
        %1061 = vmatprep.subr.mxu0 0.0
        %1062 = vmatpush1.msra.mxu0 0.0
        %1063 = vmatprep.subr.mxu0 0.0
        %1064 = vmatpush1.msra.mxu0 0.0
        %1065 = vmatprep.subr.mxu0 0.0
        %1066 = vmatpush1.msra.mxu0 0.0
        %1067 = vmatprep.subr.mxu0 0.0
        %1068 = vmatpush1.msra.mxu0 0.0
        %1069 = vmatprep.subr.mxu0 0.0
        %1070 = vmatpush1.msra.mxu0 0.0
        %1071 = vmatprep.subr.mxu0 0.0
        %1072 = vmatpush1.msra.mxu0 0.0
        %1073 = vmatprep.subr.mxu0 0.0
        %1074 = vmatpush1.msra.mxu0 0.0
        %1075 = vmatprep.subr.mxu0 0.0
        %1076 = vmatpush1.msra.mxu0 0.0
        %1077 = vmatprep.subr.mxu0 0.0
        %1078 = vmatpush1.msra.mxu0 0.0
        %1079 = vmatprep.subr.mxu0 0.0
        %1080 = vmatpush1.msra.mxu0 0.0
        %1081 = vmatprep.subr.mxu0 0.0
        %1082 = vmatpush1.msra.mxu0 0.0
        %1083 = vmatprep.subr.mxu0 0.0
        %1084 = vmatpush1.msra.mxu0 0.0
        %1085 = vmatprep.subr.mxu0 0.0
        %1086 = vmatpush1.msra.mxu0 0.0
        %1087 = vmatprep.subr.mxu0 0.0
        %1088 = vmatpush1.msra.mxu0 0.0
        %1089 = vmatprep.subr.mxu0 0.0
        %1090 = vmatpush1.msra.mxu0 0.0
        %1091 = vmatprep.subr.mxu0 0.0
        %1092 = vmatpush1.msra.mxu0 0.0
        %1093 = vmatprep.subr.mxu0 0.0
        %1094 = vmatpush1.msra.mxu0 0.0
        %1095 = vmatprep.subr.mxu0 0.0
        %1096 = vmatpush1.msra.mxu0 0.0
        %1097 = vmatprep.subr.mxu0 0.0
        %1098 = vmatpush1.msra.mxu0 0.0
        %1099 = vmatprep.subr.mxu0 0.0
        %1100 = vmatpush1.msra.mxu0 0.0
        %1101 = vmatprep.mubr.f32.mxu0 0.0
        %1102 = vmatmul.mubr.f32.gmra.mrb[0].mxu0 %v1035
        %v1103 = vpop.f32.mrb[0].mxu0
        %v1104 = vadd.f32 0.0, %v1103
        %v1105 = vpop.f32.mrb[0].mxu0
        %v1106 = vadd.f32 0.0, %v1105
        %1107 = vdwg.mxu0
        %v1108 = vadd.f32 %v1008, %v1104
        %v1109 = vadd.f32 %v1009, %v1106
        %1110 = vrot.lane.b32.xlu0 %v434, 112
        %v1111 = vpop.permute.xlu0 %1110
        %1112 = vrot.lane.b32.xlu0 %v435, 112
        %v1113 = vpop.permute.xlu0 %1112
        %vm1114 = vcmp.lt.s32.totalorder %v441, 112
        %v1115 = vsel %vm1114, %v1111, %v1113
        %v1116 = vsel %vm1114, %v1113, %v1111
        %s1117 = scalar_lea.vmem %s1, 14
        %v1118 = vld [vmem:[%s1117] sm:$0x3]
        %v1120 = vlaneseq
        %v1121 = vshrl.u32 %v1120, 7
        %v1122 = vsub.s32 0, %v1121
        %v1123 = vrot.slane %v1118, %v1122
        %v1124 = vlaneseq
        %v1125 = vshrl.u32 %v1124, 7
        %v1126 = vsub.s32 1, %v1125
        %v1127 = vrot.slane %v1118, %v1126
        %v1130 = vmul.f32 %v1115, %v1123
        %v1131 = vmul.f32 %v1116, %v1127
        %s1132 = scalar_lea.vmem %s5, 56
        %v1133 = vld [vmem:[%s1132] sm:$0xff]
        %v1135 = vsel %vm359, %v1133, 0
        %1137 = vmatprep.subr.mxu0 %v1131
        %1138 = vmatpush1.msra.mxu0 %v1130
        %1139 = vmatprep.subr.mxu0 0.0
        %1140 = vmatpush1.msra.mxu0 0.0
        %1141 = vmatprep.subr.mxu0 0.0
        %1142 = vmatpush1.msra.mxu0 0.0
        %1143 = vmatprep.subr.mxu0 0.0
        %1144 = vmatpush1.msra.mxu0 0.0
        %1145 = vmatprep.subr.mxu0 0.0
        %1146 = vmatpush1.msra.mxu0 0.0
        %1147 = vmatprep.subr.mxu0 0.0
        %1148 = vmatpush1.msra.mxu0 0.0
        %1149 = vmatprep.subr.mxu0 0.0
        %1150 = vmatpush1.msra.mxu0 0.0
        %1151 = vmatprep.subr.mxu0 0.0
        %1152 = vmatpush1.msra.mxu0 0.0
        %1153 = vmatprep.subr.mxu0 0.0
        %1154 = vmatpush1.msra.mxu0 0.0
        %1155 = vmatprep.subr.mxu0 0.0
        %1156 = vmatpush1.msra.mxu0 0.0
        %1157 = vmatprep.subr.mxu0 0.0
        %1158 = vmatpush1.msra.mxu0 0.0
        %1159 = vmatprep.subr.mxu0 0.0
        %1160 = vmatpush1.msra.mxu0 0.0
        %1161 = vmatprep.subr.mxu0 0.0
        %1162 = vmatpush1.msra.mxu0 0.0
        %1163 = vmatprep.subr.mxu0 0.0
        %1164 = vmatpush1.msra.mxu0 0.0
        %1165 = vmatprep.subr.mxu0 0.0
        %1166 = vmatpush1.msra.mxu0 0.0
        %1167 = vmatprep.subr.mxu0 0.0
        %1168 = vmatpush1.msra.mxu0 0.0
        %1169 = vmatprep.subr.mxu0 0.0
        %1170 = vmatpush1.msra.mxu0 0.0
        %1171 = vmatprep.subr.mxu0 0.0
        %1172 = vmatpush1.msra.mxu0 0.0
        %1173 = vmatprep.subr.mxu0 0.0
        %1174 = vmatpush1.msra.mxu0 0.0
        %1175 = vmatprep.subr.mxu0 0.0
        %1176 = vmatpush1.msra.mxu0 0.0
        %1177 = vmatprep.subr.mxu0 0.0
        %1178 = vmatpush1.msra.mxu0 0.0
        %1179 = vmatprep.subr.mxu0 0.0
        %1180 = vmatpush1.msra.mxu0 0.0
        %1181 = vmatprep.subr.mxu0 0.0
        %1182 = vmatpush1.msra.mxu0 0.0
        %1183 = vmatprep.subr.mxu0 0.0
        %1184 = vmatpush1.msra.mxu0 0.0
        %1185 = vmatprep.subr.mxu0 0.0
        %1186 = vmatpush1.msra.mxu0 0.0
        %1187 = vmatprep.subr.mxu0 0.0
        %1188 = vmatpush1.msra.mxu0 0.0
        %1189 = vmatprep.subr.mxu0 0.0
        %1190 = vmatpush1.msra.mxu0 0.0
        %1191 = vmatprep.subr.mxu0 0.0
        %1192 = vmatpush1.msra.mxu0 0.0
        %1193 = vmatprep.subr.mxu0 0.0
        %1194 = vmatpush1.msra.mxu0 0.0
        %1195 = vmatprep.subr.mxu0 0.0
        %1196 = vmatpush1.msra.mxu0 0.0
        %1197 = vmatprep.subr.mxu0 0.0
        %1198 = vmatpush1.msra.mxu0 0.0
        %1199 = vmatprep.subr.mxu0 0.0
        %1200 = vmatpush1.msra.mxu0 0.0
        %1201 = vmatprep.mubr.f32.mxu0 0.0
        %1202 = vmatmul.mubr.f32.gmra.mrb[0].mxu0 %v1135
        %v1203 = vpop.f32.mrb[0].mxu0
        %v1204 = vadd.f32 0.0, %v1203
        %v1205 = vpop.f32.mrb[0].mxu0
        %v1206 = vadd.f32 0.0, %v1205
        %1207 = vdwg.mxu0
        %v1208 = vadd.f32 %v1108, %v1204
        %v1209 = vadd.f32 %v1109, %v1206
        %1210 = vrot.lane.b32.xlu0 %v434, 111
        %v1211 = vpop.permute.xlu0 %1210
        %1212 = vrot.lane.b32.xlu0 %v435, 111
        %v1213 = vpop.permute.xlu0 %1212
        %vm1214 = vcmp.lt.s32.totalorder %v441, 111
        %v1215 = vsel %vm1214, %v1211, %v1213
        %v1216 = vsel %vm1214, %v1213, %v1211
        %s1217 = scalar_lea.vmem %s1, 16
        %v1218 = vld [vmem:[%s1217] sm:$0x3]
        %v1220 = vlaneseq
        %v1221 = vshrl.u32 %v1220, 7
        %v1222 = vsub.s32 0, %v1221
        %v1223 = vrot.slane %v1218, %v1222
        %v1224 = vlaneseq
        %v1225 = vshrl.u32 %v1224, 7
        %v1226 = vsub.s32 1, %v1225
        %v1227 = vrot.slane %v1218, %v1226
        %v1230 = vmul.f32 %v1215, %v1223
        %v1231 = vmul.f32 %v1216, %v1227
        %s1232 = scalar_lea.vmem %s5, 64
        %v1233 = vld [vmem:[%s1232] sm:$0xff]
        %v1235 = vsel %vm359, %v1233, 0
        %1237 = vmatprep.subr.mxu0 %v1231
        %1238 = vmatpush1.msra.mxu0 %v1230
        %1239 = vmatprep.subr.mxu0 0.0
        %1240 = vmatpush1.msra.mxu0 0.0
        %1241 = vmatprep.subr.mxu0 0.0
        %1242 = vmatpush1.msra.mxu0 0.0
        %1243 = vmatprep.subr.mxu0 0.0
        %1244 = vmatpush1.msra.mxu0 0.0
        %1245 = vmatprep.subr.mxu0 0.0
        %1246 = vmatpush1.msra.mxu0 0.0
        %1247 = vmatprep.subr.mxu0 0.0
        %1248 = vmatpush1.msra.mxu0 0.0
        %1249 = vmatprep.subr.mxu0 0.0
        %1250 = vmatpush1.msra.mxu0 0.0
        %1251 = vmatprep.subr.mxu0 0.0
        %1252 = vmatpush1.msra.mxu0 0.0
        %1253 = vmatprep.subr.mxu0 0.0
        %1254 = vmatpush1.msra.mxu0 0.0
        %1255 = vmatprep.subr.mxu0 0.0
        %1256 = vmatpush1.msra.mxu0 0.0
        %1257 = vmatprep.subr.mxu0 0.0
        %1258 = vmatpush1.msra.mxu0 0.0
        %1259 = vmatprep.subr.mxu0 0.0
        %1260 = vmatpush1.msra.mxu0 0.0
        %1261 = vmatprep.subr.mxu0 0.0
        %1262 = vmatpush1.msra.mxu0 0.0
        %1263 = vmatprep.subr.mxu0 0.0
        %1264 = vmatpush1.msra.mxu0 0.0
        %1265 = vmatprep.subr.mxu0 0.0
        %1266 = vmatpush1.msra.mxu0 0.0
        %1267 = vmatprep.subr.mxu0 0.0
        %1268 = vmatpush1.msra.mxu0 0.0
        %1269 = vmatprep.subr.mxu0 0.0
        %1270 = vmatpush1.msra.mxu0 0.0
        %1271 = vmatprep.subr.mxu0 0.0
        %1272 = vmatpush1.msra.mxu0 0.0
        %1273 = vmatprep.subr.mxu0 0.0
        %1274 = vmatpush1.msra.mxu0 0.0
        %1275 = vmatprep.subr.mxu0 0.0
        %1276 = vmatpush1.msra.mxu0 0.0
        %1277 = vmatprep.subr.mxu0 0.0
        %1278 = vmatpush1.msra.mxu0 0.0
        %1279 = vmatprep.subr.mxu0 0.0
        %1280 = vmatpush1.msra.mxu0 0.0
        %1281 = vmatprep.subr.mxu0 0.0
        %1282 = vmatpush1.msra.mxu0 0.0
        %1283 = vmatprep.subr.mxu0 0.0
        %1284 = vmatpush1.msra.mxu0 0.0
        %1285 = vmatprep.subr.mxu0 0.0
        %1286 = vmatpush1.msra.mxu0 0.0
        %1287 = vmatprep.subr.mxu0 0.0
        %1288 = vmatpush1.msra.mxu0 0.0
        %1289 = vmatprep.subr.mxu0 0.0
        %1290 = vmatpush1.msra.mxu0 0.0
        %1291 = vmatprep.subr.mxu0 0.0
        %1292 = vmatpush1.msra.mxu0 0.0
        %1293 = vmatprep.subr.mxu0 0.0
        %1294 = vmatpush1.msra.mxu0 0.0
        %1295 = vmatprep.subr.mxu0 0.0
        %1296 = vmatpush1.msra.mxu0 0.0
        %1297 = vmatprep.subr.mxu0 0.0
        %1298 = vmatpush1.msra.mxu0 0.0
        %1299 = vmatprep.subr.mxu0 0.0
        %1300 = vmatpush1.msra.mxu0 0.0
        %1301 = vmatprep.mubr.f32.mxu0 0.0
        %1302 = vmatmul.mubr.f32.gmra.mrb[0].mxu0 %v1235
        %v1303 = vpop.f32.mrb[0].mxu0
        %v1304 = vadd.f32 0.0, %v1303
        %v1305 = vpop.f32.mrb[0].mxu0
        %v1306 = vadd.f32 0.0, %v1305
        %1307 = vdwg.mxu0
        %v1308 = vadd.f32 %v1208, %v1304
        %v1309 = vadd.f32 %v1209, %v1306
        %v1310 = vld [vmem:[%s6] sm:$0xff]
        %1312 = vset.pattern.permute.xlu0 0
        %1313 = vperm.xlu0 %1312, %v1310
        %v1314 = vpop.permute.xlu0 %1313
        %v1316 = vadd.f32 %v1308, %v1314
        %v1317 = vadd.f32 %v1309, %v1314
        %v1318 = vmax.f32 %v1316, 0.0
        %v1319 = vmax.f32 %v1317, 0.0
        %v1320 = vld [vmem:[%s7] sm:$0xf]
        %v1321 = vld [vmem:[%s8] sm:$0xf]
        %1323 = vset.pattern.permute.xlu0 0
        %1324 = vperm.xlu0 %1323, %v1321
        %v1325 = vpop.permute.xlu0 %1324
        %v1328 = vsel %vm359, %v1320, 0
        %1330 = vmatprep.subr.mxu0 %v1319
        %1331 = vmatpush1.msra.mxu0 %v1318
        %1332 = vmatprep.subr.mxu0 0.0
        %1333 = vmatpush1.msra.mxu0 0.0
        %1334 = vmatprep.subr.mxu0 0.0
        %1335 = vmatpush1.msra.mxu0 0.0
        %1336 = vmatprep.subr.mxu0 0.0
        %1337 = vmatpush1.msra.mxu0 0.0
        %1338 = vmatprep.subr.mxu0 0.0
        %1339 = vmatpush1.msra.mxu0 0.0
        %1340 = vmatprep.subr.mxu0 0.0
        %1341 = vmatpush1.msra.mxu0 0.0
        %1342 = vmatprep.subr.mxu0 0.0
        %1343 = vmatpush1.msra.mxu0 0.0
        %1344 = vmatprep.subr.mxu0 0.0
        %1345 = vmatpush1.msra.mxu0 0.0
        %1346 = vmatprep.subr.mxu0 0.0
        %1347 = vmatpush1.msra.mxu0 0.0
        %1348 = vmatprep.subr.mxu0 0.0
        %1349 = vmatpush1.msra.mxu0 0.0
        %1350 = vmatprep.subr.mxu0 0.0
        %1351 = vmatpush1.msra.mxu0 0.0
        %1352 = vmatprep.subr.mxu0 0.0
        %1353 = vmatpush1.msra.mxu0 0.0
        %1354 = vmatprep.subr.mxu0 0.0
        %1355 = vmatpush1.msra.mxu0 0.0
        %1356 = vmatprep.subr.mxu0 0.0
        %1357 = vmatpush1.msra.mxu0 0.0
        %1358 = vmatprep.subr.mxu0 0.0
        %1359 = vmatpush1.msra.mxu0 0.0
        %1360 = vmatprep.subr.mxu0 0.0
        %1361 = vmatpush1.msra.mxu0 0.0
        %1362 = vmatprep.subr.mxu0 0.0
        %1363 = vmatpush1.msra.mxu0 0.0
        %1364 = vmatprep.subr.mxu0 0.0
        %1365 = vmatpush1.msra.mxu0 0.0
        %1366 = vmatprep.subr.mxu0 0.0
        %1367 = vmatpush1.msra.mxu0 0.0
        %1368 = vmatprep.subr.mxu0 0.0
        %1369 = vmatpush1.msra.mxu0 0.0
        %1370 = vmatprep.subr.mxu0 0.0
        %1371 = vmatpush1.msra.mxu0 0.0
        %1372 = vmatprep.subr.mxu0 0.0
        %1373 = vmatpush1.msra.mxu0 0.0
        %1374 = vmatprep.subr.mxu0 0.0
        %1375 = vmatpush1.msra.mxu0 0.0
        %1376 = vmatprep.subr.mxu0 0.0
        %1377 = vmatpush1.msra.mxu0 0.0
        %1378 = vmatprep.subr.mxu0 0.0
        %1379 = vmatpush1.msra.mxu0 0.0
        %1380 = vmatprep.subr.mxu0 0.0
        %1381 = vmatpush1.msra.mxu0 0.0
        %1382 = vmatprep.subr.mxu0 0.0
        %1383 = vmatpush1.msra.mxu0 0.0
        %1384 = vmatprep.subr.mxu0 0.0
        %1385 = vmatpush1.msra.mxu0 0.0
        %1386 = vmatprep.subr.mxu0 0.0
        %1387 = vmatpush1.msra.mxu0 0.0
        %1388 = vmatprep.subr.mxu0 0.0
        %1389 = vmatpush1.msra.mxu0 0.0
        %1390 = vmatprep.subr.mxu0 0.0
        %1391 = vmatpush1.msra.mxu0 0.0
        %1392 = vmatprep.subr.mxu0 0.0
        %1393 = vmatpush1.msra.mxu0 0.0
        %1394 = vmatprep.mubr.f32.mxu0 0.0
        %1395 = vmatmul.mubr.f32.gmra.mrb[0].mxu0 %v1328
        %v1396 = vpop.f32.mrb[0].mxu0
        %v1397 = vadd.f32 %v1325, %v1396
        %v1398 = vpop.f32.mrb[0].mxu0
        %v1399 = vadd.f32 %v1325, %v1398
        %1400 = vdwg.mxu0
        %v1403 = vcombine.low %v1397, %v1399
        %1405 = vst [vmem:[%s325] sm:$0xff] %v1403
        %s1406 = sand.u32 %s225, 1
        %s1407 = scalar_lea.sflag [#allocation3], %s1406
        %s1408 = sand.u32 %s225, 1
        %s1409 = smul.addr %s1408, 8
        %s1410 = scalar_lea.vmem [#allocation2], %s1409
        // Predicated region
        $region57: #{tpu_custom_call.1} parent=55 // pred_check
          %p1411 = pneg %p235
        $region58: #{tpu_custom_call.1} parent=55 // pred_check_branch
          %1413 = sbr.rel (%p1411) target = $region60
        $region59: #{tpu_custom_call.1} parent=55 // pred_region
          %s1415 = ssub.s32 128, 128
          %1416 = vsyncadd %s1407, %s1415
          %s1417 = smul.addr %s23, 2
          %s1418 = smul.addr %s1417, 64
          %s1419 = scalar_lea.hbm %s9, %s1418
          %s1421 = sshll.u32 %s1410, 4
          %s1422 = int_to_ptr.vmem [resolvable:$true] %s1421
          %1424 = dma.vmem_to_hbm [thread:$0]  %s1422, 128, %s1419, %s1407
        $region60: #{tpu_custom_call.1} parent=55 // pred_fallthru
          _
      $region56: #{tpu_custom_call.1} parent=5 // pred_fallthru
        _
      %p1425 = scmp.le.s32.totalorder 2, %s18
      // Predicated region
      $region61: #{tpu_custom_call.1} parent=5 // pred_check
        %p1426 = pneg %p1425
      $region62: #{tpu_custom_call.1} parent=5 // pred_check_branch
        %1428 = sbr.rel (%p1426) target = $region64
      $region63: #{tpu_custom_call.1} parent=5 // pred_region
        %s1429 = ssub.s32 %s18, 2
        // Predicated region
        $region65: #{tpu_custom_call.1} parent=63 // pred_check
          %p1430 = pneg %p241
        $region66: #{tpu_custom_call.1} parent=63 // pred_check_branch
          %1432 = sbr.rel (%p1430) target = $region68
        $region67: #{tpu_custom_call.1} parent=63 // pred_region
          %s1433 = sand.u32 %s226, 1
          %s1434 = scalar_lea.sflag [#allocation3], %s1433
          %s1435 = sand.u32 %s226, 1
          %s1436 = smul.addr %s1435, 8
          %s1437 = scalar_lea.vmem [#allocation2], %s1436
          %1438 = dma.done %s1434, 128
        $region68: #{tpu_custom_call.1} parent=63 // pred_fallthru
          _
      $region64: #{tpu_custom_call.1} parent=5 // pred_fallthru
        _
    $region6: #{tpu_custom_call.1} parent=1 // loop_footer
      %s22 = sadd.s32 1, %s18
    $region7: #{tpu_custom_call.1} parent=1 // loop_footer_branch
      %17 = sbr.rel target = $region3
    $region8: #{tpu_custom_call.1} parent=1 // loop_exit
      _
    %1439 = vsyncpa [#allocation3], 1
    %s1440 = scalar_lea.sflag [#allocation3], 1
    %1441 = vsyncpa %s1440, 1

</llo_original>
